<compile_context>
chip_gen: v7x
topology: tpu7x:2x2x1
jax: 0.10.0
libtpu: 0.0.40
codegen_flags: <defaults>
</compile_context>

<pallas_src>
import functools

import jax
import jax.numpy as jnp
from jax import lax
from jax.experimental import pallas as pl
from jax.experimental.pallas import tpu as pltpu

# ---------------- problem sizes (small, deterministic) ----------------
B = 2          # batch
DIM = 32       # input / output channels ("dim")
HEADS = 4
DIM_HEAD = 32
HIDDEN = HEADS * DIM_HEAD   # 128
N = 128        # sequence length
SCALE = DIM_HEAD ** (-0.5)
EPS = 1e-12    # F.normalize eps


def _rlca_kernel(wq_ref, wk_ref, wv_ref, wo_ref, bg_ref,
                 q_ref, k_ref, v_ref, o_ref, *, nb):
    """One grid step processes `nb` batch elements (static unrolled loop)."""
    wq = wq_ref[...]
    wk = wk_ref[...]
    wv = wv_ref[...]
    wo = wo_ref[...]
    bg = bg_ref[...]              # (DIM, 2): [:, 0] = conv bias, [:, 1] = g * sqrt(dim)
    bo = bg[:, 0:1]               # (DIM, 1)
    g = bg[:, 1:2]                # (DIM, 1)  (already scaled by sqrt(dim) in wrapper)

    for b in range(nb):
        x = q_ref[b]              # (DIM, N) -- also the residual input

        # 1x1 Conv1d (no bias) == channel matmul: (HIDDEN, DIM) @ (DIM, N)
        qp = jnp.dot(wq, x, preferred_element_type=jnp.float32)          # (HIDDEN, N)
        kp = jnp.dot(wk, k_ref[b], preferred_element_type=jnp.float32)
        vp = jnp.dot(wv, v_ref[b], preferred_element_type=jnp.float32)

        heads = []
        for h in range(HEADS):
            s = h * DIM_HEAD
            qh = qp[s:s + DIM_HEAD, :]        # (DIM_HEAD, N)
            kh = kp[s:s + DIM_HEAD, :]
            vh = vp[s:s + DIM_HEAD, :]

            # q.softmax(dim=-2): over head channels (sublanes).
            # Only the reduced (1, N) sum hits the EUP (reciprocal), rest is VPU.
            qh = jnp.exp(qh - jnp.max(qh, axis=0, keepdims=True))
            qh = qh * pl.reciprocal(jnp.sum(qh, axis=0, keepdims=True), approx=False)

            # k.softmax(dim=-1): over the sequence axis (lanes).
            kh = jnp.exp(kh - jnp.max(kh, axis=1, keepdims=True))
            kh = kh * pl.reciprocal(jnp.sum(kh, axis=1, keepdims=True), approx=False)

            # ctx^T[e, d] = sum_n v[e, n] * k[d, n]   (no explicit transpose needed)
            ctxT = lax.dot_general(vh, kh, (((1,), (1,)), ((), ())),
                                   preferred_element_type=jnp.float32)   # (DH, DH)
            # SCALE folded into the tiny (DH, DH) tile instead of the (DH, N) tile.
            heads.append(jnp.dot(ctxT * SCALE, qh,
                                 preferred_element_type=jnp.float32))    # (DH, N)

        # Heads stay in vregs; single fused output projection (32,128)@(128,128).
        attn = jnp.concatenate(heads, axis=0)                            # (HIDDEN, N)

        # to_out[0]: 1x1 Conv1d with bias.
        y = jnp.dot(wo, attn, preferred_element_type=jnp.float32) + bo   # (DIM, N)

        # to_out[1]: RMSNorm(dim) == F.normalize(y, dim=channels) * g * sqrt(dim).
        # rsqrt on the reduced (1, N) sum-of-squares; max(ss, EPS^2) == max(norm, EPS).
        ss = jnp.sum(y * y, axis=0, keepdims=True)                       # (1, N)
        y = y * lax.rsqrt(jnp.maximum(ss, EPS * EPS)) * g

        # Residual wrapper: fn(x, ...) + x
        o_ref[b] = y + x


def _build_call(nb):
    wspec = lambda shape: pl.BlockSpec(shape, lambda i: (0, 0))
    iospec = pl.BlockSpec((nb, DIM, N), lambda i: (i, 0, 0))
    return pl.pallas_call(
        functools.partial(_rlca_kernel, nb=nb),
        out_shape=jax.ShapeDtypeStruct((B, DIM, N), jnp.float32),
        grid_spec=pltpu.PrefetchScalarGridSpec(
            num_scalar_prefetch=0,
            grid=(B // nb,),
            in_specs=[
                wspec((HIDDEN, DIM)),   # wq
                wspec((HIDDEN, DIM)),   # wk
                wspec((HIDDEN, DIM)),   # wv
                wspec((DIM, HIDDEN)),   # wo
                wspec((DIM, 2)),        # packed [conv bias | g * sqrt(dim)]
                iospec,                 # q
                iospec,                 # k
                iospec,                 # v
            ],
            out_specs=iospec,
        ),
        compiler_params=pltpu.CompilerParams(
            dimension_semantics=("parallel",)),
    )


@functools.partial(jax.jit, static_argnames=("nb",))
def _run(wq, wk, wv, wo, bg, q, k, v, *, nb):
    return _build_call(nb)(wq, wk, wv, wo, bg, q, k, v)


def _fold_batch_into_one_step():
    """True on single-TensorCore chips (v5e/v6e), where the grid is a serial loop."""
    try:
        kind = jax.devices()[0].device_kind.lower()
    except Exception:
        return False
    return any(t in kind for t in ("v5 lite", "v5e", "v5litepod", "v6 lite", "v6e"))


def residual_linear_cross_attention(q, k, v, wq, wk, wv, wo, bo, g):
    # Pack conv bias and the pre-scaled RMSNorm gain into a single (DIM, 2) operand
    # (drops one BlockSpec/DMA); fold the sqrt(dim) constant here, out of the kernel.
    bg = jnp.stack([bo, g * (DIM ** 0.5)], axis=-1).astype(jnp.float32)
    # v5e/v6e: fold the whole batch into one grid step. v7x (2 TCs): keep grid=(B,)
    # with "parallel" semantics so batches land on different TensorCores.
    nb = B if _fold_batch_into_one_step() else 1
    return _run(wq, wk, wv, wo, bg, q, k, v, nb=nb)


def _reference(q, k, v, wq, wk, wv, wo, bo, g):
    """Pure-JAX reference mirroring the PyTorch forward (Residual(LinearCrossAttention))."""
    def proj(w, x):  # 1x1 conv, no bias
        return jnp.einsum('oc,bcn->bon', w, x)
    qp, kp, vp = proj(wq, q), proj(wk, k), proj(wv, v)

    def split(t):  # b (h c) n -> b h c n
        b, _, n = t.shape
        return t.reshape(b, HEADS, DIM_HEAD, n)
    qh, kh, vh = split(qp), split(kp), split(vp)

    qh = jax.nn.softmax(qh, axis=-2) * SCALE
    kh = jax.nn.softmax(kh, axis=-1)
    ctx = jnp.einsum('bhdn,bhen->bhde', kh, vh)
    out = jnp.einsum('bhde,bhdn->bhen', ctx, qh)
    out = out.reshape(out.shape[0], HIDDEN, out.shape[-1])

    y = jnp.einsum('oc,bcn->bon', wo, out) + bo.reshape(1, DIM, 1)
    norm = jnp.sqrt(jnp.sum(y * y, axis=1, keepdims=True))
    y = y / jnp.maximum(norm, EPS)
    y = y * g.reshape(1, DIM, 1) * (DIM ** 0.5)
    return y + q   # Residual wrapper


if __name__ == "__main__":
    key = jax.random.PRNGKey(0)
    ks = jax.random.split(key, 9)

    # Deterministic synthetic parameters (shapes from the module's __init__).
    wq = jax.random.normal(ks[0], (HIDDEN, DIM), jnp.float32) * 0.1   # Conv1d(dim->hidden,1)
    wk = jax.random.normal(ks[1], (HIDDEN, DIM), jnp.float32) * 0.1
    wv = jax.random.normal(ks[2], (HIDDEN, DIM), jnp.float32) * 0.1
    wo = jax.random.normal(ks[3], (DIM, HIDDEN), jnp.float32) * 0.1   # Conv1d(hidden->dim,1)
    bo = jax.random.normal(ks[4], (DIM,), jnp.float32) * 0.1          # its bias
    g = jnp.ones((DIM,), jnp.float32) + 0.1 * jax.random.normal(ks[5], (DIM,), jnp.float32)

    # Inputs (NCW, like the PyTorch Conv1d inputs).
    q = jax.random.normal(ks[6], (B, DIM, N), jnp.float32)
    k = jax.random.normal(ks[7], (B, DIM, N), jnp.float32)
    v = jax.random.normal(ks[8], (B, DIM, N), jnp.float32)

    out = residual_linear_cross_attention(q, k, v, wq, wk, wv, wo, bo, g)
    out = jax.block_until_ready(out)

    ref = _reference(q, k, v, wq, wk, wv, wo, bo, g)
    assert out.shape == (B, DIM, N)
    err = float(jnp.max(jnp.abs(out - ref)))
    assert jnp.allclose(out, ref, atol=1e-4, rtol=1e-4), err

    print("KERNEL_OK")
</pallas_src>

<mosaic_0001>
module attributes {stable_mosaic.version = 11 : i64} {
  func.func @_rlca_kernel(%arg0: i32, %arg1: memref<128x32xf32, #tpu.memory_space<vmem>>, %arg2: memref<128x32xf32, #tpu.memory_space<vmem>>, %arg3: memref<128x32xf32, #tpu.memory_space<vmem>>, %arg4: memref<32x128xf32, #tpu.memory_space<vmem>>, %arg5: memref<32x2xf32, #tpu.memory_space<vmem>>, %arg6: memref<1x32x128xf32, #tpu.memory_space<vmem>>, %arg7: memref<1x32x128xf32, #tpu.memory_space<vmem>>, %arg8: memref<1x32x128xf32, #tpu.memory_space<vmem>>, %arg9: memref<1x32x128xf32, #tpu.memory_space<vmem>>) attributes {dimension_semantics = [#tpu.dimension_semantics<parallel>], iteration_bounds = array<i64: 2>, scalar_prefetch = 0 : i64, scratch_operands = 0 : i64, tpu.core_type = #tpu.core_type<tc>, window_params = [{pipeline_mode = #tpu.pipeline_mode<synchronous>, transform_indices = @transform_0, window_bounds = array<i64: 128, 32>}, {pipeline_mode = #tpu.pipeline_mode<synchronous>, transform_indices = @transform_1, window_bounds = array<i64: 128, 32>}, {pipeline_mode = #tpu.pipeline_mode<synchronous>, transform_indices = @transform_2, window_bounds = array<i64: 128, 32>}, {pipeline_mode = #tpu.pipeline_mode<synchronous>, transform_indices = @transform_3, window_bounds = array<i64: 32, 128>}, {pipeline_mode = #tpu.pipeline_mode<synchronous>, transform_indices = @transform_4, window_bounds = array<i64: 32, 2>}, {transform_indices = @transform_5, window_bounds = array<i64: 1, 32, 128>}, {transform_indices = @transform_6, window_bounds = array<i64: 1, 32, 128>}, {transform_indices = @transform_7, window_bounds = array<i64: 1, 32, 128>}, {transform_indices = @transform_8, window_bounds = array<i64: 1, 32, 128>}]} {
    %c0 = arith.constant 0 : index
    %c0_0 = arith.constant 0 : index
    %0 = vector.load %arg1[%c0, %c0_0] : memref<128x32xf32, #tpu.memory_space<vmem>>, vector<128x32xf32>
    %c0_1 = arith.constant 0 : index
    %c0_2 = arith.constant 0 : index
    %1 = vector.load %arg2[%c0_1, %c0_2] : memref<128x32xf32, #tpu.memory_space<vmem>>, vector<128x32xf32>
    %c0_3 = arith.constant 0 : index
    %c0_4 = arith.constant 0 : index
    %2 = vector.load %arg3[%c0_3, %c0_4] : memref<128x32xf32, #tpu.memory_space<vmem>>, vector<128x32xf32>
    %c0_5 = arith.constant 0 : index
    %c0_6 = arith.constant 0 : index
    %3 = vector.load %arg4[%c0_5, %c0_6] : memref<32x128xf32, #tpu.memory_space<vmem>>, vector<32x128xf32>
    %c0_7 = arith.constant 0 : index
    %c0_8 = arith.constant 0 : index
    %4 = vector.load %arg5[%c0_7, %c0_8] : memref<32x2xf32, #tpu.memory_space<vmem>>, vector<32x2xf32>
    %5 = vector.extract_strided_slice %4 {offsets = [0, 0], sizes = [32, 1], strides = [1, 1]} : vector<32x2xf32> to vector<32x1xf32>
    %6 = vector.extract_strided_slice %4 {offsets = [0, 1], sizes = [32, 1], strides = [1, 1]} : vector<32x2xf32> to vector<32x1xf32>
    %c0_9 = arith.constant 0 : index
    %c0_10 = arith.constant 0 : index
    %c0_11 = arith.constant 0 : index
    %7 = vector.load %arg6[%c0_9, %c0_10, %c0_11] : memref<1x32x128xf32, #tpu.memory_space<vmem>>, vector<1x32x128xf32>
    %8 = vector.shape_cast %7 : vector<1x32x128xf32> to vector<32x128xf32>
    %cst = arith.constant dense<0.000000e+00> : vector<128x128xf32>
    %9 = tpu.matmul %0, %8, %cst {dimension_numbers = #tpu.dot_dimension_numbers<[1], [0], [0], [1], [0, 0, 1, 1], [], []>} : vector<128x32xf32>, vector<32x128xf32>, vector<128x128xf32> -> vector<128x128xf32>
    %c0_12 = arith.constant 0 : index
    %c0_13 = arith.constant 0 : index
    %c0_14 = arith.constant 0 : index
    %10 = vector.load %arg7[%c0_12, %c0_13, %c0_14] : memref<1x32x128xf32, #tpu.memory_space<vmem>>, vector<1x32x128xf32>
    %11 = vector.shape_cast %10 : vector<1x32x128xf32> to vector<32x128xf32>
    %cst_15 = arith.constant dense<0.000000e+00> : vector<128x128xf32>
    %12 = tpu.matmul %1, %11, %cst_15 {dimension_numbers = #tpu.dot_dimension_numbers<[1], [0], [0], [1], [0, 0, 1, 1], [], []>} : vector<128x32xf32>, vector<32x128xf32>, vector<128x128xf32> -> vector<128x128xf32>
    %c0_16 = arith.constant 0 : index
    %c0_17 = arith.constant 0 : index
    %c0_18 = arith.constant 0 : index
    %13 = vector.load %arg8[%c0_16, %c0_17, %c0_18] : memref<1x32x128xf32, #tpu.memory_space<vmem>>, vector<1x32x128xf32>
    %14 = vector.shape_cast %13 : vector<1x32x128xf32> to vector<32x128xf32>
    %cst_19 = arith.constant dense<0.000000e+00> : vector<128x128xf32>
    %15 = tpu.matmul %2, %14, %cst_19 {dimension_numbers = #tpu.dot_dimension_numbers<[1], [0], [0], [1], [0, 0, 1, 1], [], []>} : vector<128x32xf32>, vector<32x128xf32>, vector<128x128xf32> -> vector<128x128xf32>
    %16 = vector.extract_strided_slice %9 {offsets = [0, 0], sizes = [32, 128], strides = [1, 1]} : vector<128x128xf32> to vector<32x128xf32>
    %17 = vector.extract_strided_slice %12 {offsets = [0, 0], sizes = [32, 128], strides = [1, 1]} : vector<128x128xf32> to vector<32x128xf32>
    %18 = vector.extract_strided_slice %15 {offsets = [0, 0], sizes = [32, 128], strides = [1, 1]} : vector<128x128xf32> to vector<32x128xf32>
    %cst_20 = arith.constant dense<0xFF800000> : vector<128xf32>
    %19 = vector.multi_reduction <maximumf>, %16, %cst_20 [0] : vector<32x128xf32> to vector<128xf32>
    %20 = vector.shape_cast %19 : vector<128xf32> to vector<1x128xf32>
    %21 = vector.broadcast %20 : vector<1x128xf32> to vector<32x128xf32>
    %22 = arith.subf %16, %21 : vector<32x128xf32>
    %23 = math.exp %22 : vector<32x128xf32>
    %cst_21 = arith.constant dense<0.000000e+00> : vector<128xf32>
    %24 = vector.multi_reduction <add>, %23, %cst_21 [0] : vector<32x128xf32> to vector<128xf32>
    %25 = vector.shape_cast %24 : vector<128xf32> to vector<1x128xf32>
    %26 = tpu.reciprocal %25 : vector<1x128xf32> -> vector<1x128xf32>
    %27 = vector.broadcast %26 : vector<1x128xf32> to vector<32x128xf32>
    %28 = arith.mulf %23, %27 : vector<32x128xf32>
    %cst_22 = arith.constant dense<0xFF800000> : vector<32xf32>
    %29 = vector.multi_reduction <maximumf>, %17, %cst_22 [1] : vector<32x128xf32> to vector<32xf32>
    %30 = vector.shape_cast %29 : vector<32xf32> to vector<32x1xf32>
    %31 = vector.broadcast %30 : vector<32x1xf32> to vector<32x128xf32>
    %32 = arith.subf %17, %31 : vector<32x128xf32>
    %33 = math.exp %32 : vector<32x128xf32>
    %cst_23 = arith.constant dense<0.000000e+00> : vector<32xf32>
    %34 = vector.multi_reduction <add>, %33, %cst_23 [1] : vector<32x128xf32> to vector<32xf32>
    %35 = vector.shape_cast %34 : vector<32xf32> to vector<32x1xf32>
    %36 = tpu.reciprocal %35 : vector<32x1xf32> -> vector<32x1xf32>
    %37 = vector.broadcast %36 : vector<32x1xf32> to vector<32x128xf32>
    %38 = arith.mulf %33, %37 : vector<32x128xf32>
    %cst_24 = arith.constant dense<0.000000e+00> : vector<32x32xf32>
    %39 = tpu.matmul %18, %38, %cst_24 {dimension_numbers = #tpu.dot_dimension_numbers<[1], [1], [0], [0], [0, 0, 1, 0], [], []>} : vector<32x128xf32>, vector<32x128xf32>, vector<32x32xf32> -> vector<32x32xf32>
    %cst_25 = arith.constant 0.176776692 : f32
    %40 = vector.broadcast %cst_25 : f32 to vector<32x32xf32>
    %41 = arith.mulf %39, %40 : vector<32x32xf32>
    %cst_26 = arith.constant dense<0.000000e+00> : vector<32x128xf32>
    %42 = tpu.matmul %41, %28, %cst_26 {dimension_numbers = #tpu.dot_dimension_numbers<[1], [0], [0], [1], [0, 0, 1, 1], [], []>} : vector<32x32xf32>, vector<32x128xf32>, vector<32x128xf32> -> vector<32x128xf32>
    %43 = vector.extract_strided_slice %9 {offsets = [32, 0], sizes = [32, 128], strides = [1, 1]} : vector<128x128xf32> to vector<32x128xf32>
    %44 = vector.extract_strided_slice %12 {offsets = [32, 0], sizes = [32, 128], strides = [1, 1]} : vector<128x128xf32> to vector<32x128xf32>
    %45 = vector.extract_strided_slice %15 {offsets = [32, 0], sizes = [32, 128], strides = [1, 1]} : vector<128x128xf32> to vector<32x128xf32>
    %cst_27 = arith.constant dense<0xFF800000> : vector<128xf32>
    %46 = vector.multi_reduction <maximumf>, %43, %cst_27 [0] : vector<32x128xf32> to vector<128xf32>
    %47 = vector.shape_cast %46 : vector<128xf32> to vector<1x128xf32>
    %48 = vector.broadcast %47 : vector<1x128xf32> to vector<32x128xf32>
    %49 = arith.subf %43, %48 : vector<32x128xf32>
    %50 = math.exp %49 : vector<32x128xf32>
    %cst_28 = arith.constant dense<0.000000e+00> : vector<128xf32>
    %51 = vector.multi_reduction <add>, %50, %cst_28 [0] : vector<32x128xf32> to vector<128xf32>
    %52 = vector.shape_cast %51 : vector<128xf32> to vector<1x128xf32>
    %53 = tpu.reciprocal %52 : vector<1x128xf32> -> vector<1x128xf32>
    %54 = vector.broadcast %53 : vector<1x128xf32> to vector<32x128xf32>
    %55 = arith.mulf %50, %54 : vector<32x128xf32>
    %cst_29 = arith.constant dense<0xFF800000> : vector<32xf32>
    %56 = vector.multi_reduction <maximumf>, %44, %cst_29 [1] : vector<32x128xf32> to vector<32xf32>
    %57 = vector.shape_cast %56 : vector<32xf32> to vector<32x1xf32>
    %58 = vector.broadcast %57 : vector<32x1xf32> to vector<32x128xf32>
    %59 = arith.subf %44, %58 : vector<32x128xf32>
    %60 = math.exp %59 : vector<32x128xf32>
    %cst_30 = arith.constant dense<0.000000e+00> : vector<32xf32>
    %61 = vector.multi_reduction <add>, %60, %cst_30 [1] : vector<32x128xf32> to vector<32xf32>
    %62 = vector.shape_cast %61 : vector<32xf32> to vector<32x1xf32>
    %63 = tpu.reciprocal %62 : vector<32x1xf32> -> vector<32x1xf32>
    %64 = vector.broadcast %63 : vector<32x1xf32> to vector<32x128xf32>
    %65 = arith.mulf %60, %64 : vector<32x128xf32>
    %cst_31 = arith.constant dense<0.000000e+00> : vector<32x32xf32>
    %66 = tpu.matmul %45, %65, %cst_31 {dimension_numbers = #tpu.dot_dimension_numbers<[1], [1], [0], [0], [0, 0, 1, 0], [], []>} : vector<32x128xf32>, vector<32x128xf32>, vector<32x32xf32> -> vector<32x32xf32>
    %cst_32 = arith.constant 0.176776692 : f32
    %67 = vector.broadcast %cst_32 : f32 to vector<32x32xf32>
    %68 = arith.mulf %66, %67 : vector<32x32xf32>
    %cst_33 = arith.constant dense<0.000000e+00> : vector<32x128xf32>
    %69 = tpu.matmul %68, %55, %cst_33 {dimension_numbers = #tpu.dot_dimension_numbers<[1], [0], [0], [1], [0, 0, 1, 1], [], []>} : vector<32x32xf32>, vector<32x128xf32>, vector<32x128xf32> -> vector<32x128xf32>
    %70 = vector.extract_strided_slice %9 {offsets = [64, 0], sizes = [32, 128], strides = [1, 1]} : vector<128x128xf32> to vector<32x128xf32>
    %71 = vector.extract_strided_slice %12 {offsets = [64, 0], sizes = [32, 128], strides = [1, 1]} : vector<128x128xf32> to vector<32x128xf32>
    %72 = vector.extract_strided_slice %15 {offsets = [64, 0], sizes = [32, 128], strides = [1, 1]} : vector<128x128xf32> to vector<32x128xf32>
    %cst_34 = arith.constant dense<0xFF800000> : vector<128xf32>
    %73 = vector.multi_reduction <maximumf>, %70, %cst_34 [0] : vector<32x128xf32> to vector<128xf32>
    %74 = vector.shape_cast %73 : vector<128xf32> to vector<1x128xf32>
    %75 = vector.broadcast %74 : vector<1x128xf32> to vector<32x128xf32>
    %76 = arith.subf %70, %75 : vector<32x128xf32>
    %77 = math.exp %76 : vector<32x128xf32>
    %cst_35 = arith.constant dense<0.000000e+00> : vector<128xf32>
    %78 = vector.multi_reduction <add>, %77, %cst_35 [0] : vector<32x128xf32> to vector<128xf32>
    %79 = vector.shape_cast %78 : vector<128xf32> to vector<1x128xf32>
    %80 = tpu.reciprocal %79 : vector<1x128xf32> -> vector<1x128xf32>
    %81 = vector.broadcast %80 : vector<1x128xf32> to vector<32x128xf32>
    %82 = arith.mulf %77, %81 : vector<32x128xf32>
    %cst_36 = arith.constant dense<0xFF800000> : vector<32xf32>
    %83 = vector.multi_reduction <maximumf>, %71, %cst_36 [1] : vector<32x128xf32> to vector<32xf32>
    %84 = vector.shape_cast %83 : vector<32xf32> to vector<32x1xf32>
    %85 = vector.broadcast %84 : vector<32x1xf32> to vector<32x128xf32>
    %86 = arith.subf %71, %85 : vector<32x128xf32>
    %87 = math.exp %86 : vector<32x128xf32>
    %cst_37 = arith.constant dense<0.000000e+00> : vector<32xf32>
    %88 = vector.multi_reduction <add>, %87, %cst_37 [1] : vector<32x128xf32> to vector<32xf32>
    %89 = vector.shape_cast %88 : vector<32xf32> to vector<32x1xf32>
    %90 = tpu.reciprocal %89 : vector<32x1xf32> -> vector<32x1xf32>
    %91 = vector.broadcast %90 : vector<32x1xf32> to vector<32x128xf32>
    %92 = arith.mulf %87, %91 : vector<32x128xf32>
    %cst_38 = arith.constant dense<0.000000e+00> : vector<32x32xf32>
    %93 = tpu.matmul %72, %92, %cst_38 {dimension_numbers = #tpu.dot_dimension_numbers<[1], [1], [0], [0], [0, 0, 1, 0], [], []>} : vector<32x128xf32>, vector<32x128xf32>, vector<32x32xf32> -> vector<32x32xf32>
    %cst_39 = arith.constant 0.176776692 : f32
    %94 = vector.broadcast %cst_39 : f32 to vector<32x32xf32>
    %95 = arith.mulf %93, %94 : vector<32x32xf32>
    %cst_40 = arith.constant dense<0.000000e+00> : vector<32x128xf32>
    %96 = tpu.matmul %95, %82, %cst_40 {dimension_numbers = #tpu.dot_dimension_numbers<[1], [0], [0], [1], [0, 0, 1, 1], [], []>} : vector<32x32xf32>, vector<32x128xf32>, vector<32x128xf32> -> vector<32x128xf32>
    %97 = vector.extract_strided_slice %9 {offsets = [96, 0], sizes = [32, 128], strides = [1, 1]} : vector<128x128xf32> to vector<32x128xf32>
    %98 = vector.extract_strided_slice %12 {offsets = [96, 0], sizes = [32, 128], strides = [1, 1]} : vector<128x128xf32> to vector<32x128xf32>
    %99 = vector.extract_strided_slice %15 {offsets = [96, 0], sizes = [32, 128], strides = [1, 1]} : vector<128x128xf32> to vector<32x128xf32>
    %cst_41 = arith.constant dense<0xFF800000> : vector<128xf32>
    %100 = vector.multi_reduction <maximumf>, %97, %cst_41 [0] : vector<32x128xf32> to vector<128xf32>
    %101 = vector.shape_cast %100 : vector<128xf32> to vector<1x128xf32>
    %102 = vector.broadcast %101 : vector<1x128xf32> to vector<32x128xf32>
    %103 = arith.subf %97, %102 : vector<32x128xf32>
    %104 = math.exp %103 : vector<32x128xf32>
    %cst_42 = arith.constant dense<0.000000e+00> : vector<128xf32>
    %105 = vector.multi_reduction <add>, %104, %cst_42 [0] : vector<32x128xf32> to vector<128xf32>
    %106 = vector.shape_cast %105 : vector<128xf32> to vector<1x128xf32>
    %107 = tpu.reciprocal %106 : vector<1x128xf32> -> vector<1x128xf32>
    %108 = vector.broadcast %107 : vector<1x128xf32> to vector<32x128xf32>
    %109 = arith.mulf %104, %108 : vector<32x128xf32>
    %cst_43 = arith.constant dense<0xFF800000> : vector<32xf32>
    %110 = vector.multi_reduction <maximumf>, %98, %cst_43 [1] : vector<32x128xf32> to vector<32xf32>
    %111 = vector.shape_cast %110 : vector<32xf32> to vector<32x1xf32>
    %112 = vector.broadcast %111 : vector<32x1xf32> to vector<32x128xf32>
    %113 = arith.subf %98, %112 : vector<32x128xf32>
    %114 = math.exp %113 : vector<32x128xf32>
    %cst_44 = arith.constant dense<0.000000e+00> : vector<32xf32>
    %115 = vector.multi_reduction <add>, %114, %cst_44 [1] : vector<32x128xf32> to vector<32xf32>
    %116 = vector.shape_cast %115 : vector<32xf32> to vector<32x1xf32>
    %117 = tpu.reciprocal %116 : vector<32x1xf32> -> vector<32x1xf32>
    %118 = vector.broadcast %117 : vector<32x1xf32> to vector<32x128xf32>
    %119 = arith.mulf %114, %118 : vector<32x128xf32>
    %cst_45 = arith.constant dense<0.000000e+00> : vector<32x32xf32>
    %120 = tpu.matmul %99, %119, %cst_45 {dimension_numbers = #tpu.dot_dimension_numbers<[1], [1], [0], [0], [0, 0, 1, 0], [], []>} : vector<32x128xf32>, vector<32x128xf32>, vector<32x32xf32> -> vector<32x32xf32>
    %cst_46 = arith.constant 0.176776692 : f32
    %121 = vector.broadcast %cst_46 : f32 to vector<32x32xf32>
    %122 = arith.mulf %120, %121 : vector<32x32xf32>
    %cst_47 = arith.constant dense<0.000000e+00> : vector<32x128xf32>
    %123 = tpu.matmul %122, %109, %cst_47 {dimension_numbers = #tpu.dot_dimension_numbers<[1], [0], [0], [1], [0, 0, 1, 1], [], []>} : vector<32x32xf32>, vector<32x128xf32>, vector<32x128xf32> -> vector<32x128xf32>
    %124 = tpu.concatenate %42, %69, %96, %123 in 0 : vector<32x128xf32>, vector<32x128xf32>, vector<32x128xf32>, vector<32x128xf32> -> vector<128x128xf32>
    %cst_48 = arith.constant dense<0.000000e+00> : vector<32x128xf32>
    %125 = tpu.matmul %3, %124, %cst_48 {dimension_numbers = #tpu.dot_dimension_numbers<[1], [0], [0], [1], [0, 0, 1, 1], [], []>} : vector<32x128xf32>, vector<128x128xf32>, vector<32x128xf32> -> vector<32x128xf32>
    %126 = vector.broadcast %5 : vector<32x1xf32> to vector<32x128xf32>
    %127 = arith.addf %125, %126 : vector<32x128xf32>
    %128 = arith.mulf %127, %127 : vector<32x128xf32>
    %cst_49 = arith.constant dense<0.000000e+00> : vector<128xf32>
    %129 = vector.multi_reduction <add>, %128, %cst_49 [0] : vector<32x128xf32> to vector<128xf32>
    %130 = vector.shape_cast %129 : vector<128xf32> to vector<1x128xf32>
    %cst_50 = arith.constant 1.000000e-24 : f32
    %131 = vector.broadcast %cst_50 : f32 to vector<1x128xf32>
    %132 = arith.maximumf %130, %131 : vector<1x128xf32>
    %133 = math.rsqrt %132 : vector<1x128xf32>
    %134 = vector.broadcast %133 : vector<1x128xf32> to vector<32x128xf32>
    %135 = arith.mulf %127, %134 : vector<32x128xf32>
    %136 = vector.broadcast %6 : vector<32x1xf32> to vector<32x128xf32>
    %137 = arith.mulf %135, %136 : vector<32x128xf32>
    %138 = arith.addf %137, %8 : vector<32x128xf32>
    %c0_51 = arith.constant 0 : index
    %c0_52 = arith.constant 0 : index
    %c0_53 = arith.constant 0 : index
    %139 = vector.load %arg9[%c0_51, %c0_52, %c0_53] : memref<1x32x128xf32, #tpu.memory_space<vmem>>, vector<1x32x128xf32>
    %140 = vector.shape_cast %139 : vector<1x32x128xf32> to vector<32x128xf32>
    %141 = vector.shape_cast %138 : vector<32x128xf32> to vector<1x32x128xf32>
    tpu.vector_store %arg9[%c0_51, %c0_52, %c0_53], %141 {strides = array<i32>} : memref<1x32x128xf32, #tpu.memory_space<vmem>>, vector<1x32x128xf32>,
    return
  }
  func.func @transform_0(%arg0: i32) -> (i32, i32) {
    %c0_i32 = arith.constant 0 : i32
    %c0_i32_0 = arith.constant 0 : i32
    %c0_i32_1 = arith.constant 0 : i32
    return %c0_i32, %c0_i32_0 : i32, i32
  }
  func.func @transform_1(%arg0: i32) -> (i32, i32) {
    %c0_i32 = arith.constant 0 : i32
    %c0_i32_0 = arith.constant 0 : i32
    %c0_i32_1 = arith.constant 0 : i32
    return %c0_i32, %c0_i32_0 : i32, i32
  }
  func.func @transform_2(%arg0: i32) -> (i32, i32) {
    %c0_i32 = arith.constant 0 : i32
    %c0_i32_0 = arith.constant 0 : i32
    %c0_i32_1 = arith.constant 0 : i32
    return %c0_i32, %c0_i32_0 : i32, i32
  }
  func.func @transform_3(%arg0: i32) -> (i32, i32) {
    %c0_i32 = arith.constant 0 : i32
    %c0_i32_0 = arith.constant 0 : i32
    %c0_i32_1 = arith.constant 0 : i32
    return %c0_i32, %c0_i32_0 : i32, i32
  }
  func.func @transform_4(%arg0: i32) -> (i32, i32) {
    %c0_i32 = arith.constant 0 : i32
    %c0_i32_0 = arith.constant 0 : i32
    %c0_i32_1 = arith.constant 0 : i32
    return %c0_i32, %c0_i32_0 : i32, i32
  }
  func.func @transform_5(%arg0: i32) -> (i32, i32, i32) {
    %c0_i32 = arith.constant 0 : i32
    %c0_i32_0 = arith.constant 0 : i32
    %c0_i32_1 = arith.constant 0 : i32
    return %arg0, %c0_i32, %c0_i32_0 : i32, i32, i32
  }
  func.func @transform_6(%arg0: i32) -> (i32, i32, i32) {
    %c0_i32 = arith.constant 0 : i32
    %c0_i32_0 = arith.constant 0 : i32
    %c0_i32_1 = arith.constant 0 : i32
    return %arg0, %c0_i32, %c0_i32_0 : i32, i32, i32
  }
  func.func @transform_7(%arg0: i32) -> (i32, i32, i32) {
    %c0_i32 = arith.constant 0 : i32
    %c0_i32_0 = arith.constant 0 : i32
    %c0_i32_1 = arith.constant 0 : i32
    return %arg0, %c0_i32, %c0_i32_0 : i32, i32, i32
  }
  func.func @transform_8(%arg0: i32) -> (i32, i32, i32) {
    %c0_i32 = arith.constant 0 : i32
    %c0_i32_0 = arith.constant 0 : i32
    %c0_i32_1 = arith.constant 0 : i32
    return %arg0, %c0_i32, %c0_i32_0 : i32, i32, i32
  }
}

</mosaic_0001>

<llo_original>
// kernel: _run.1
$region0: #{_run.1}
  #allocation0 [shape = 'u32[]', space=smem, size = 0x4, offset = 0x4, fixed_abs, tag = 'smem constant byte address 0x4 - core index']
  #allocation1 [shape = 'u32[144,128]{1,0:T(1,128)}', space=vmem, size = 0x12000, scoped, tag = 'internal scratch']
  %s0 = inlined_call_operand.vmem [shape: f32[128,32], index: 0, kind: input, shape index: {}]
  %s1 = inlined_call_operand.vmem [shape: f32[128,32], index: 1, kind: input, shape index: {}]
  %s2 = inlined_call_operand.vmem [shape: f32[128,32], index: 2, kind: input, shape index: {}]
  %s3 = inlined_call_operand.vmem [shape: f32[32,128], index: 3, kind: input, shape index: {}]
  %s4 = inlined_call_operand.vmem [shape: f32[32,2], index: 4, kind: input, shape index: {}]
  %s5 = inlined_call_operand.vmem [shape: f32[2,32,128], index: 5, kind: input, shape index: {}]
  %s6 = inlined_call_operand.vmem [shape: f32[2,32,128], index: 6, kind: input, shape index: {}]
  %s7 = inlined_call_operand.vmem [shape: f32[2,32,128], index: 7, kind: input, shape index: {}]
  %s8 = inlined_call_operand.hbm [shape: f32[2,32,128], index: 8, kind: output, shape index: {}]
  %s9 = sld [smem:[#allocation0]]
  $region65: #{_run.1} parent=0
    _
  %s11 = ssub.s32 1, %s9
  %s12 = scalar_select 0, %s11, %s9
  $region1: #{_run.1} parent=0
    #allocation2 [shape = 'u8[32768]{0}', space=vmem, size = 0x8000, scoped, tag = 'output window, operand 0']
    #allocation3 [shape = 's32[2]{0}', space=sflag, size = 0x8, scoped, tag = 'scoped memory for _run.1']
    %13 = vsyncpa [#allocation3], 0
    %s14 = scalar_lea.sflag [#allocation3], 1
    %15 = vsyncpa %s14, 0
    loop: start=0, step=1, limit=4
    $region2: #{_run.1} parent=1 // loop_pre_header
      _
    $region3: #{_run.1} parent=1 // loop_header
      %s17 = sphi 0, %s21
      %p18 = scmp.ge.s32.totalorder %s17, 4
      %s25 = sphi 0, %s25
      %s27 = sphi 0, %s25
      %s28 = sphi 0, %s27
      %s42 = sphi 0, %s28
      %s46 = sphi 0, %s46
      %s48 = sphi 0, %s46
      %s49 = sphi 0, %s48
      %s63 = sphi 0, %s49
      %s67 = sphi 0, %s67
      %s69 = sphi 0, %s67
      %s70 = sphi 0, %s69
      %s84 = sphi 0, %s70
      %s88 = sphi 0, %s88
      %s90 = sphi 0, %s88
      %s91 = sphi 0, %s90
      %s105 = sphi 0, %s91
      %s109 = sphi 0, %s109
      %s111 = sphi 0, %s109
      %s112 = sphi 0, %s111
      %s126 = sphi 0, %s112
      %s132 = sphi 0, %s134
      %s135 = sphi 0, %s132
      %s136 = sphi 0, %s135
      %s152 = sphi 0, %s136
      %s158 = sphi 0, %s160
      %s161 = sphi 0, %s158
      %s162 = sphi 0, %s161
      %s178 = sphi 0, %s162
      %s184 = sphi 0, %s186
      %s187 = sphi 0, %s184
      %s188 = sphi 0, %s187
      %s204 = sphi 0, %s188
      %s210 = sphi 0, %s212
      %s213 = sphi 0, %s210
      %s214 = sphi 0, %s213
      %s230 = sphi 0, %s214
    $region4: #{_run.1} parent=1 // loop_header_branch
      %20 = sbr.rel (%p18) target = $region8
    $region5: #{_run.1} parent=1 // loop_body
      %s22 = ssub.s32 %s17, 1
      %s23 = ssub.s32 %s17, 2
      %s24 = sadd.s32 %s17, 1
      %s26 = sadd.s32 %s25, 1
      %p29 = scmp.eq.s32.totalorder %s17, 1
      %p30 = scmp.ne.s32.totalorder %s25, %s27
      %p31 = scmp.eq.s32.totalorder %s17, 0
      %p32 = por %p30, %p31
      %p33 = scmp.ne.s32.totalorder %s25, %s27
      %p34 = scmp.eq.s32.totalorder %s22, 1
      %p35 = por %p33, %p34
      %p36 = scmp.ne.s32.totalorder %s27, %s28
      %p37 = scmp.eq.s32.totalorder %s22, 0
      %p38 = por %p36, %p37
      %p39 = scmp.ne.s32.totalorder %s27, %s28
      %p40 = scmp.eq.s32.totalorder %s23, 1
      %p41 = por %p39, %p40
      %p43 = scmp.ne.s32.totalorder %s28, %s42
      %p44 = scmp.eq.s32.totalorder %s23, 0
      %p45 = por %p43, %p44
      %s47 = sadd.s32 %s46, 1
      %p50 = scmp.eq.s32.totalorder %s17, 1
      %p51 = scmp.ne.s32.totalorder %s46, %s48
      %p52 = scmp.eq.s32.totalorder %s17, 0
      %p53 = por %p51, %p52
      %p54 = scmp.ne.s32.totalorder %s46, %s48
      %p55 = scmp.eq.s32.totalorder %s22, 1
      %p56 = por %p54, %p55
      %p57 = scmp.ne.s32.totalorder %s48, %s49
      %p58 = scmp.eq.s32.totalorder %s22, 0
      %p59 = por %p57, %p58
      %p60 = scmp.ne.s32.totalorder %s48, %s49
      %p61 = scmp.eq.s32.totalorder %s23, 1
      %p62 = por %p60, %p61
      %p64 = scmp.ne.s32.totalorder %s49, %s63
      %p65 = scmp.eq.s32.totalorder %s23, 0
      %p66 = por %p64, %p65
      %s68 = sadd.s32 %s67, 1
      %p71 = scmp.eq.s32.totalorder %s17, 1
      %p72 = scmp.ne.s32.totalorder %s67, %s69
      %p73 = scmp.eq.s32.totalorder %s17, 0
      %p74 = por %p72, %p73
      %p75 = scmp.ne.s32.totalorder %s67, %s69
      %p76 = scmp.eq.s32.totalorder %s22, 1
      %p77 = por %p75, %p76
      %p78 = scmp.ne.s32.totalorder %s69, %s70
      %p79 = scmp.eq.s32.totalorder %s22, 0
      %p80 = por %p78, %p79
      %p81 = scmp.ne.s32.totalorder %s69, %s70
      %p82 = scmp.eq.s32.totalorder %s23, 1
      %p83 = por %p81, %p82
      %p85 = scmp.ne.s32.totalorder %s70, %s84
      %p86 = scmp.eq.s32.totalorder %s23, 0
      %p87 = por %p85, %p86
      %s89 = sadd.s32 %s88, 1
      %p92 = scmp.eq.s32.totalorder %s17, 1
      %p93 = scmp.ne.s32.totalorder %s88, %s90
      %p94 = scmp.eq.s32.totalorder %s17, 0
      %p95 = por %p93, %p94
      %p96 = scmp.ne.s32.totalorder %s88, %s90
      %p97 = scmp.eq.s32.totalorder %s22, 1
      %p98 = por %p96, %p97
      %p99 = scmp.ne.s32.totalorder %s90, %s91
      %p100 = scmp.eq.s32.totalorder %s22, 0
      %p101 = por %p99, %p100
      %p102 = scmp.ne.s32.totalorder %s90, %s91
      %p103 = scmp.eq.s32.totalorder %s23, 1
      %p104 = por %p102, %p103
      %p106 = scmp.ne.s32.totalorder %s91, %s105
      %p107 = scmp.eq.s32.totalorder %s23, 0
      %p108 = por %p106, %p107
      %s110 = sadd.s32 %s109, 1
      %p113 = scmp.eq.s32.totalorder %s17, 1
      %p114 = scmp.ne.s32.totalorder %s109, %s111
      %p115 = scmp.eq.s32.totalorder %s17, 0
      %p116 = por %p114, %p115
      %p117 = scmp.ne.s32.totalorder %s109, %s111
      %p118 = scmp.eq.s32.totalorder %s22, 1
      %p119 = por %p117, %p118
      %p120 = scmp.ne.s32.totalorder %s111, %s112
      %p121 = scmp.eq.s32.totalorder %s22, 0
      %p122 = por %p120, %p121
      %p123 = scmp.ne.s32.totalorder %s111, %s112
      %p124 = scmp.eq.s32.totalorder %s23, 1
      %p125 = por %p123, %p124
      %p127 = scmp.ne.s32.totalorder %s112, %s126
      %p128 = scmp.eq.s32.totalorder %s23, 0
      %p129 = por %p127, %p128
      %s130 = ssub.s32 %s17, %s24
      %p131 = scmp.eq.s32.totalorder %s130, 0
      %s133 = sadd.s32 %s132, 1
      %s134 = scalar_select %p131, %s132, %s133
      %p137 = pneg %p131
      %p138 = scmp.eq.s32.totalorder %s17, 1
      %p139 = por %p137, %p138
      %p140 = scmp.ne.s32.totalorder %s132, %s135
      %p141 = scmp.eq.s32.totalorder %s17, 0
      %p142 = por %p140, %p141
      %p143 = scmp.ne.s32.totalorder %s132, %s135
      %p144 = scmp.eq.s32.totalorder %s22, 1
      %p145 = por %p143, %p144
      %p146 = scmp.ne.s32.totalorder %s135, %s136
      %p147 = scmp.eq.s32.totalorder %s22, 0
      %p148 = por %p146, %p147
      %p149 = scmp.ne.s32.totalorder %s135, %s136
      %p150 = scmp.eq.s32.totalorder %s23, 1
      %p151 = por %p149, %p150
      %p153 = scmp.ne.s32.totalorder %s136, %s152
      %p154 = scmp.eq.s32.totalorder %s23, 0
      %p155 = por %p153, %p154
      %s156 = ssub.s32 %s17, %s24
      %p157 = scmp.eq.s32.totalorder %s156, 0
      %s159 = sadd.s32 %s158, 1
      %s160 = scalar_select %p157, %s158, %s159
      %p163 = pneg %p157
      %p164 = scmp.eq.s32.totalorder %s17, 1
      %p165 = por %p163, %p164
      %p166 = scmp.ne.s32.totalorder %s158, %s161
      %p167 = scmp.eq.s32.totalorder %s17, 0
      %p168 = por %p166, %p167
      %p169 = scmp.ne.s32.totalorder %s158, %s161
      %p170 = scmp.eq.s32.totalorder %s22, 1
      %p171 = por %p169, %p170
      %p172 = scmp.ne.s32.totalorder %s161, %s162
      %p173 = scmp.eq.s32.totalorder %s22, 0
      %p174 = por %p172, %p173
      %p175 = scmp.ne.s32.totalorder %s161, %s162
      %p176 = scmp.eq.s32.totalorder %s23, 1
      %p177 = por %p175, %p176
      %p179 = scmp.ne.s32.totalorder %s162, %s178
      %p180 = scmp.eq.s32.totalorder %s23, 0
      %p181 = por %p179, %p180
      %s182 = ssub.s32 %s17, %s24
      %p183 = scmp.eq.s32.totalorder %s182, 0
      %s185 = sadd.s32 %s184, 1
      %s186 = scalar_select %p183, %s184, %s185
      %p189 = pneg %p183
      %p190 = scmp.eq.s32.totalorder %s17, 1
      %p191 = por %p189, %p190
      %p192 = scmp.ne.s32.totalorder %s184, %s187
      %p193 = scmp.eq.s32.totalorder %s17, 0
      %p194 = por %p192, %p193
      %p195 = scmp.ne.s32.totalorder %s184, %s187
      %p196 = scmp.eq.s32.totalorder %s22, 1
      %p197 = por %p195, %p196
      %p198 = scmp.ne.s32.totalorder %s187, %s188
      %p199 = scmp.eq.s32.totalorder %s22, 0
      %p200 = por %p198, %p199
      %p201 = scmp.ne.s32.totalorder %s187, %s188
      %p202 = scmp.eq.s32.totalorder %s23, 1
      %p203 = por %p201, %p202
      %p205 = scmp.ne.s32.totalorder %s188, %s204
      %p206 = scmp.eq.s32.totalorder %s23, 0
      %p207 = por %p205, %p206
      %s208 = ssub.s32 %s17, %s24
      %p209 = scmp.eq.s32.totalorder %s208, 0
      %s211 = sadd.s32 %s210, 1
      %s212 = scalar_select %p209, %s210, %s211
      %p215 = pneg %p209
      %p216 = scmp.eq.s32.totalorder %s17, 1
      %p217 = por %p215, %p216
      %p218 = scmp.ne.s32.totalorder %s210, %s213
      %p219 = scmp.eq.s32.totalorder %s17, 0
      %p220 = por %p218, %p219
      %p221 = scmp.ne.s32.totalorder %s210, %s213
      %p222 = scmp.eq.s32.totalorder %s22, 1
      %p223 = por %p221, %p222
      %p224 = scmp.ne.s32.totalorder %s213, %s214
      %p225 = scmp.eq.s32.totalorder %s22, 0
      %p226 = por %p224, %p225
      %p227 = scmp.ne.s32.totalorder %s213, %s214
      %p228 = scmp.eq.s32.totalorder %s23, 1
      %p229 = por %p227, %p228
      %p231 = scmp.ne.s32.totalorder %s214, %s230
      %p232 = scmp.eq.s32.totalorder %s23, 0
      %p233 = por %p231, %p232
      %p234 = scmp.le.s32.totalorder 1, %s17
      %p235 = scmp.lt.s32.totalorder %s17, 3
      %p236 = pnand %p234, %p235
      %p237 = pneg %p236
      // Predicated region
      $region9: #{_run.1} parent=5 // pred_check
        _
      $region10: #{_run.1} parent=5 // pred_check_branch
        %239 = sbr.rel (%p236) target = $region12
      $region11: #{_run.1} parent=5 // pred_region
        %s240 = ssub.s32 %s17, 1
        // Predicated region
        $region13: #{_run.1} parent=11 // pred_check
          %p241 = pneg %p38
        $region14: #{_run.1} parent=11 // pred_check_branch
          %243 = sbr.rel (%p241) target = $region16
        $region15: #{_run.1} parent=11 // pred_region
          _
        $region16: #{_run.1} parent=11 // pred_fallthru
          _
        // Predicated region
        $region17: #{_run.1} parent=11 // pred_check
          %p244 = pneg %p59
        $region18: #{_run.1} parent=11 // pred_check_branch
          %246 = sbr.rel (%p244) target = $region20
        $region19: #{_run.1} parent=11 // pred_region
          _
        $region20: #{_run.1} parent=11 // pred_fallthru
          _
        // Predicated region
        $region21: #{_run.1} parent=11 // pred_check
          %p247 = pneg %p80
        $region22: #{_run.1} parent=11 // pred_check_branch
          %249 = sbr.rel (%p247) target = $region24
        $region23: #{_run.1} parent=11 // pred_region
          _
        $region24: #{_run.1} parent=11 // pred_fallthru
          _
        // Predicated region
        $region25: #{_run.1} parent=11 // pred_check
          %p250 = pneg %p101
        $region26: #{_run.1} parent=11 // pred_check_branch
          %252 = sbr.rel (%p250) target = $region28
        $region27: #{_run.1} parent=11 // pred_region
          _
        $region28: #{_run.1} parent=11 // pred_fallthru
          _
        // Predicated region
        $region29: #{_run.1} parent=11 // pred_check
          %p253 = pneg %p122
        $region30: #{_run.1} parent=11 // pred_check_branch
          %255 = sbr.rel (%p253) target = $region32
        $region31: #{_run.1} parent=11 // pred_region
          _
        $region32: #{_run.1} parent=11 // pred_fallthru
          _
      $region12: #{_run.1} parent=5 // pred_fallthru
        _
      %p256 = scmp.lt.s32.totalorder %s17, 2
      // Predicated region
      $region33: #{_run.1} parent=5 // pred_check
        %p257 = pneg %p256
      $region34: #{_run.1} parent=5 // pred_check_branch
        %259 = sbr.rel (%p257) target = $region36
      $region35: #{_run.1} parent=5 // pred_region
        // Predicated region
        $region37: #{_run.1} parent=35 // pred_check
          %p260 = pneg %p142
        $region38: #{_run.1} parent=35 // pred_check_branch
          %262 = sbr.rel (%p260) target = $region40
        $region39: #{_run.1} parent=35 // pred_region
          %p263 = scmp.lt.s32.totalorder %s17, 1
          %s264 = scalar_select %p263, %s17, 1
          %s265 = smul.addr %s264, 4
          %s266 = smul.addr %s265, 8
          %s267 = scalar_lea.vmem %s5, %s266
        $region40: #{_run.1} parent=35 // pred_fallthru
          _
        // Predicated region
        $region41: #{_run.1} parent=35 // pred_check
          %p268 = pneg %p168
        $region42: #{_run.1} parent=35 // pred_check_branch
          %270 = sbr.rel (%p268) target = $region44
        $region43: #{_run.1} parent=35 // pred_region
          %p271 = scmp.lt.s32.totalorder %s17, 1
          %s272 = scalar_select %p271, %s17, 1
          %s273 = smul.addr %s272, 4
          %s274 = smul.addr %s273, 8
          %s275 = scalar_lea.vmem %s6, %s274
        $region44: #{_run.1} parent=35 // pred_fallthru
          _
        // Predicated region
        $region45: #{_run.1} parent=35 // pred_check
          %p276 = pneg %p194
        $region46: #{_run.1} parent=35 // pred_check_branch
          %278 = sbr.rel (%p276) target = $region48
        $region47: #{_run.1} parent=35 // pred_region
          %p279 = scmp.lt.s32.totalorder %s17, 1
          %s280 = scalar_select %p279, %s17, 1
          %s281 = smul.addr %s280, 4
          %s282 = smul.addr %s281, 8
          %s283 = scalar_lea.vmem %s7, %s282
        $region48: #{_run.1} parent=35 // pred_fallthru
          _
      $region36: #{_run.1} parent=5 // pred_fallthru
        _
      %p284 = scmp.le.s32.totalorder 1, %s17
      %p285 = scmp.lt.s32.totalorder %s17, 3
      %p286 = pnand %p284, %p285
      %p287 = pneg %p286
      // Predicated region
      $region49: #{_run.1} parent=5 // pred_check
        _
      $region50: #{_run.1} parent=5 // pred_check_branch
        %289 = sbr.rel (%p286) target = $region52
      $region51: #{_run.1} parent=5 // pred_region
        %s290 = ssub.s32 %s17, 1
        %p291 = pneg %p38
        %p292 = pneg %p35
        %p293 = pneg %p59
        %p294 = pneg %p56
        %p295 = pneg %p80
        %p296 = pneg %p77
        %p297 = pneg %p101
        %p298 = pneg %p98
        %p299 = pneg %p122
        %p300 = pneg %p119
        %p301 = scmp.lt.s32.totalorder %s22, 1
        %s302 = scalar_select %p301, %s22, 1
        %s303 = smul.addr %s302, 4
        %s304 = smul.addr %s303, 8
        %s305 = scalar_lea.vmem %s5, %s304
        %p306 = pneg %p148
        %p307 = pneg %p145
        %p308 = scmp.lt.s32.totalorder %s22, 1
        %s309 = scalar_select %p308, %s22, 1
        %s310 = smul.addr %s309, 4
        %s311 = smul.addr %s310, 8
        %s312 = scalar_lea.vmem %s6, %s311
        %p313 = pneg %p174
        %p314 = pneg %p171
        %p315 = scmp.lt.s32.totalorder %s22, 1
        %s316 = scalar_select %p315, %s22, 1
        %s317 = smul.addr %s316, 4
        %s318 = smul.addr %s317, 8
        %s319 = scalar_lea.vmem %s7, %s318
        %p320 = pneg %p200
        %p321 = pneg %p197
        %p322 = pneg %p226
        %p323 = pneg %p223
        %s324 = sand.u32 %s213, 1
        %s325 = scalar_lea.sflag [#allocation3], %s324
        %s326 = sand.u32 %s213, 1
        %s327 = smul.addr %s326, 32
        %s328 = scalar_lea.vmem [#allocation2], %s327
        %p329 = scmp.lt.s32.totalorder %s22, 1
        %s330 = scalar_select %p329, %s22, 1
        %s331 = smul.addr %s330, 4
        %s332 = smul.addr %s331, 8
        %s333 = scalar_lea.vmem %s5, %s332
        %p334 = scmp.lt.s32.totalorder %s22, 1
        %s335 = scalar_select %p334, %s22, 1
        %s336 = smul.addr %s335, 4
        %s337 = smul.addr %s336, 8
        %s338 = scalar_lea.vmem %s6, %s337
        %p339 = scmp.lt.s32.totalorder %s22, 1
        %s340 = scalar_select %p339, %s22, 1
        %s341 = smul.addr %s340, 4
        %s342 = smul.addr %s341, 8
        %s343 = scalar_lea.vmem %s7, %s342
        %v344 = vld [vmem:[%s0] sm:$0xff]
        %v345 = vld [vmem:[%s0 + $0x8] sm:$0xff]
        %v346 = vld [vmem:[%s0 + $0x10] sm:$0xff]
        %v347 = vld [vmem:[%s0 + $0x18] sm:$0xff]
        %v348 = vld [vmem:[%s0 + $0x20] sm:$0xff]
        %v349 = vld [vmem:[%s0 + $0x28] sm:$0xff]
        %v350 = vld [vmem:[%s0 + $0x30] sm:$0xff]
        %v351 = vld [vmem:[%s0 + $0x38] sm:$0xff]
        %v352 = vld [vmem:[%s0 + $0x40] sm:$0xff]
        %v353 = vld [vmem:[%s0 + $0x48] sm:$0xff]
        %v354 = vld [vmem:[%s0 + $0x50] sm:$0xff]
        %v355 = vld [vmem:[%s0 + $0x58] sm:$0xff]
        %v356 = vld [vmem:[%s0 + $0x60] sm:$0xff]
        %v357 = vld [vmem:[%s0 + $0x68] sm:$0xff]
        %v358 = vld [vmem:[%s0 + $0x70] sm:$0xff]
        %v359 = vld [vmem:[%s0 + $0x78] sm:$0xff]
        %v360 = vld [vmem:[%s1] sm:$0xff]
        %v361 = vld [vmem:[%s1 + $0x8] sm:$0xff]
        %v362 = vld [vmem:[%s1 + $0x10] sm:$0xff]
        %v363 = vld [vmem:[%s1 + $0x18] sm:$0xff]
        %v364 = vld [vmem:[%s1 + $0x20] sm:$0xff]
        %v365 = vld [vmem:[%s1 + $0x28] sm:$0xff]
        %v366 = vld [vmem:[%s1 + $0x30] sm:$0xff]
        %v367 = vld [vmem:[%s1 + $0x38] sm:$0xff]
        %v368 = vld [vmem:[%s1 + $0x40] sm:$0xff]
        %v369 = vld [vmem:[%s1 + $0x48] sm:$0xff]
        %v370 = vld [vmem:[%s1 + $0x50] sm:$0xff]
        %v371 = vld [vmem:[%s1 + $0x58] sm:$0xff]
        %v372 = vld [vmem:[%s1 + $0x60] sm:$0xff]
        %v373 = vld [vmem:[%s1 + $0x68] sm:$0xff]
        %v374 = vld [vmem:[%s1 + $0x70] sm:$0xff]
        %v375 = vld [vmem:[%s1 + $0x78] sm:$0xff]
        %v376 = vld [vmem:[%s2] sm:$0xff]
        %v377 = vld [vmem:[%s2 + $0x8] sm:$0xff]
        %v378 = vld [vmem:[%s2 + $0x10] sm:$0xff]
        %v379 = vld [vmem:[%s2 + $0x18] sm:$0xff]
        %v380 = vld [vmem:[%s2 + $0x20] sm:$0xff]
        %v381 = vld [vmem:[%s2 + $0x28] sm:$0xff]
        %v382 = vld [vmem:[%s2 + $0x30] sm:$0xff]
        %v383 = vld [vmem:[%s2 + $0x38] sm:$0xff]
        %v384 = vld [vmem:[%s2 + $0x40] sm:$0xff]
        %v385 = vld [vmem:[%s2 + $0x48] sm:$0xff]
        %v386 = vld [vmem:[%s2 + $0x50] sm:$0xff]
        %v387 = vld [vmem:[%s2 + $0x58] sm:$0xff]
        %v388 = vld [vmem:[%s2 + $0x60] sm:$0xff]
        %v389 = vld [vmem:[%s2 + $0x68] sm:$0xff]
        %v390 = vld [vmem:[%s2 + $0x70] sm:$0xff]
        %v391 = vld [vmem:[%s2 + $0x78] sm:$0xff]
        %v392 = vld [vmem:[%s3] sm:$0xff]
        %v393 = vld [vmem:[%s3 + $0x8] sm:$0xff]
        %v394 = vld [vmem:[%s3 + $0x10] sm:$0xff]
        %v395 = vld [vmem:[%s3 + $0x18] sm:$0xff]
        %v396 = vld [vmem:[%s4] sm:$0xff]
        %v397 = vld [vmem:[%s4 + $0x8] sm:$0xff]
        %v398 = vld [vmem:[%s4 + $0x10] sm:$0xff]
        %v399 = vld [vmem:[%s4 + $0x18] sm:$0xff]
        %v400 = vld [vmem:[%s333] sm:$0xff]
        %v401 = vld [vmem:[%s333 + $0x8] sm:$0xff]
        %v402 = vld [vmem:[%s333 + $0x10] sm:$0xff]
        %v403 = vld [vmem:[%s333 + $0x18] sm:$0xff]
        %vm404 = vcmask 261120
        %v406 = vsel %vm404, %v344, 0
        %v409 = vsel %vm404, %v345, 0
        %v412 = vsel %vm404, %v346, 0
        %v415 = vsel %vm404, %v347, 0
        %v418 = vsel %vm404, %v348, 0
        %v421 = vsel %vm404, %v349, 0
        %v424 = vsel %vm404, %v350, 0
        %v427 = vsel %vm404, %v351, 0
        %v430 = vsel %vm404, %v352, 0
        %v433 = vsel %vm404, %v353, 0
        %v436 = vsel %vm404, %v354, 0
        %v439 = vsel %vm404, %v355, 0
        %v442 = vsel %vm404, %v356, 0
        %v445 = vsel %vm404, %v357, 0
        %v448 = vsel %vm404, %v358, 0
        %v451 = vsel %vm404, %v359, 0
        %453 = vmatprep.subr.mxu0 0.0
        %454 = vmatpush1.msra.mxu0 %v400
        %455 = vmatprep.subr.mxu0 0.0
        %456 = vmatpush1.msra.mxu0 %v401
        %457 = vmatprep.subr.mxu0 0.0
        %458 = vmatpush1.msra.mxu0 %v402
        %459 = vmatprep.subr.mxu0 0.0
        %460 = vmatpush1.msra.mxu0 %v403
        %461 = vmatprep.subr.mxu0 0.0
        %462 = vmatpush1.msra.mxu0 0.0
        %463 = vmatprep.subr.mxu0 0.0
        %464 = vmatpush1.msra.mxu0 0.0
        %465 = vmatprep.subr.mxu0 0.0
        %466 = vmatpush1.msra.mxu0 0.0
        %467 = vmatprep.subr.mxu0 0.0
        %468 = vmatpush1.msra.mxu0 0.0
        %469 = vmatprep.subr.mxu0 0.0
        %470 = vmatpush1.msra.mxu0 0.0
        %471 = vmatprep.subr.mxu0 0.0
        %472 = vmatpush1.msra.mxu0 0.0
        %473 = vmatprep.subr.mxu0 0.0
        %474 = vmatpush1.msra.mxu0 0.0
        %475 = vmatprep.subr.mxu0 0.0
        %476 = vmatpush1.msra.mxu0 0.0
        %477 = vmatprep.subr.mxu0 0.0
        %478 = vmatpush1.msra.mxu0 0.0
        %479 = vmatprep.subr.mxu0 0.0
        %480 = vmatpush1.msra.mxu0 0.0
        %481 = vmatprep.subr.mxu0 0.0
        %482 = vmatpush1.msra.mxu0 0.0
        %483 = vmatprep.subr.mxu0 0.0
        %484 = vmatpush1.msra.mxu0 0.0
        %485 = vmatprep.subr.mxu0 0.0
        %486 = vmatpush1.msra.mxu0 0.0
        %487 = vmatprep.subr.mxu0 0.0
        %488 = vmatpush1.msra.mxu0 0.0
        %489 = vmatprep.subr.mxu0 0.0
        %490 = vmatpush1.msra.mxu0 0.0
        %491 = vmatprep.subr.mxu0 0.0
        %492 = vmatpush1.msra.mxu0 0.0
        %493 = vmatprep.subr.mxu0 0.0
        %494 = vmatpush1.msra.mxu0 0.0
        %495 = vmatprep.subr.mxu0 0.0
        %496 = vmatpush1.msra.mxu0 0.0
        %497 = vmatprep.subr.mxu0 0.0
        %498 = vmatpush1.msra.mxu0 0.0
        %499 = vmatprep.subr.mxu0 0.0
        %500 = vmatpush1.msra.mxu0 0.0
        %501 = vmatprep.subr.mxu0 0.0
        %502 = vmatpush1.msra.mxu0 0.0
        %503 = vmatprep.subr.mxu0 0.0
        %504 = vmatpush1.msra.mxu0 0.0
        %505 = vmatprep.subr.mxu0 0.0
        %506 = vmatpush1.msra.mxu0 0.0
        %507 = vmatprep.subr.mxu0 0.0
        %508 = vmatpush1.msra.mxu0 0.0
        %509 = vmatprep.subr.mxu0 0.0
        %510 = vmatpush1.msra.mxu0 0.0
        %511 = vmatprep.subr.mxu0 0.0
        %512 = vmatpush1.msra.mxu0 0.0
        %513 = vmatprep.subr.mxu0 0.0
        %514 = vmatpush1.msra.mxu0 0.0
        %515 = vmatprep.subr.mxu0 0.0
        %516 = vmatpush1.msra.mxu0 0.0
        %517 = vmatprep.mubr.f32.mxu0 0.0
        %518 = vmatmul.mubr.f32.gmra.mrb[0].mxu0 %v406
        %v519 = vpop.f32.mrb[0].mxu0
        %v520 = vadd.f32 0.0, %v519
        %v521 = vpop.f32.mrb[0].mxu0
        %522 = vmatprep.mubr.f32.mxu0 0.0
        %523 = vmatmul.mubr.f32.gmra.mrb[0].mxu0 %v409
        %v524 = vpop.f32.mrb[0].mxu0
        %v525 = vadd.f32 0.0, %v524
        %v526 = vpop.f32.mrb[0].mxu0
        %527 = vmatprep.mubr.f32.mxu0 0.0
        %528 = vmatmul.mubr.f32.gmra.mrb[0].mxu0 %v412
        %v529 = vpop.f32.mrb[0].mxu0
        %v530 = vadd.f32 0.0, %v529
        %v531 = vpop.f32.mrb[0].mxu0
        %532 = vmatprep.mubr.f32.mxu0 0.0
        %533 = vmatmul.mubr.f32.gmra.mrb[0].mxu0 %v415
        %v534 = vpop.f32.mrb[0].mxu0
        %v535 = vadd.f32 0.0, %v534
        %v536 = vpop.f32.mrb[0].mxu0
        %537 = vmatprep.mubr.f32.mxu0 0.0
        %538 = vmatmul.mubr.f32.gmra.mrb[0].mxu0 %v418
        %v539 = vpop.f32.mrb[0].mxu0
        %v540 = vadd.f32 0.0, %v539
        %v541 = vpop.f32.mrb[0].mxu0
        %542 = vmatprep.mubr.f32.mxu0 0.0
        %543 = vmatmul.mubr.f32.gmra.mrb[0].mxu0 %v421
        %v544 = vpop.f32.mrb[0].mxu0
        %v545 = vadd.f32 0.0, %v544
        %v546 = vpop.f32.mrb[0].mxu0
        %547 = vmatprep.mubr.f32.mxu0 0.0
        %548 = vmatmul.mubr.f32.gmra.mrb[0].mxu0 %v424
        %v549 = vpop.f32.mrb[0].mxu0
        %v550 = vadd.f32 0.0, %v549
        %v551 = vpop.f32.mrb[0].mxu0
        %552 = vmatprep.mubr.f32.mxu0 0.0
        %553 = vmatmul.mubr.f32.gmra.mrb[0].mxu0 %v427
        %v554 = vpop.f32.mrb[0].mxu0
        %v555 = vadd.f32 0.0, %v554
        %v556 = vpop.f32.mrb[0].mxu0
        %557 = vmatprep.mubr.f32.mxu0 0.0
        %558 = vmatmul.mubr.f32.gmra.mrb[0].mxu0 %v430
        %v559 = vpop.f32.mrb[0].mxu0
        %v560 = vadd.f32 0.0, %v559
        %v561 = vpop.f32.mrb[0].mxu0
        %562 = vmatprep.mubr.f32.mxu0 0.0
        %563 = vmatmul.mubr.f32.gmra.mrb[0].mxu0 %v433
        %v564 = vpop.f32.mrb[0].mxu0
        %v565 = vadd.f32 0.0, %v564
        %v566 = vpop.f32.mrb[0].mxu0
        %567 = vmatprep.mubr.f32.mxu0 0.0
        %568 = vmatmul.mubr.f32.gmra.mrb[0].mxu0 %v436
        %v569 = vpop.f32.mrb[0].mxu0
        %v570 = vadd.f32 0.0, %v569
        %v571 = vpop.f32.mrb[0].mxu0
        %572 = vmatprep.mubr.f32.mxu0 0.0
        %573 = vmatmul.mubr.f32.gmra.mrb[0].mxu0 %v439
        %v574 = vpop.f32.mrb[0].mxu0
        %v575 = vadd.f32 0.0, %v574
        %v576 = vpop.f32.mrb[0].mxu0
        %577 = vmatprep.mubr.f32.mxu0 0.0
        %578 = vmatmul.mubr.f32.gmra.mrb[0].mxu0 %v442
        %v579 = vpop.f32.mrb[0].mxu0
        %v580 = vadd.f32 0.0, %v579
        %v581 = vpop.f32.mrb[0].mxu0
        %582 = vmatprep.mubr.f32.mxu0 0.0
        %583 = vmatmul.mubr.f32.gmra.mrb[0].mxu0 %v445
        %v584 = vpop.f32.mrb[0].mxu0
        %v585 = vadd.f32 0.0, %v584
        %v586 = vpop.f32.mrb[0].mxu0
        %587 = vmatprep.mubr.f32.mxu0 0.0
        %588 = vmatmul.mubr.f32.gmra.mrb[0].mxu0 %v448
        %v589 = vpop.f32.mrb[0].mxu0
        %v590 = vadd.f32 0.0, %v589
        %v591 = vpop.f32.mrb[0].mxu0
        %592 = vmatprep.mubr.f32.mxu0 0.0
        %593 = vmatmul.mubr.f32.gmra.mrb[0].mxu0 %v451
        %v594 = vpop.f32.mrb[0].mxu0
        %v595 = vadd.f32 0.0, %v594
        %v596 = vpop.f32.mrb[0].mxu0
        %597 = vdwg.mxu0
        %v598 = vld [vmem:[%s338] sm:$0xff]
        %v599 = vld [vmem:[%s338 + $0x8] sm:$0xff]
        %v600 = vld [vmem:[%s338 + $0x10] sm:$0xff]
        %v601 = vld [vmem:[%s338 + $0x18] sm:$0xff]
        %v603 = vsel %vm404, %v360, 0
        %v606 = vsel %vm404, %v361, 0
        %v609 = vsel %vm404, %v362, 0
        %v612 = vsel %vm404, %v363, 0
        %v615 = vsel %vm404, %v364, 0
        %v618 = vsel %vm404, %v365, 0
        %v621 = vsel %vm404, %v366, 0
        %v624 = vsel %vm404, %v367, 0
        %v627 = vsel %vm404, %v368, 0
        %v630 = vsel %vm404, %v369, 0
        %v633 = vsel %vm404, %v370, 0
        %v636 = vsel %vm404, %v371, 0
        %v639 = vsel %vm404, %v372, 0
        %v642 = vsel %vm404, %v373, 0
        %v645 = vsel %vm404, %v374, 0
        %v648 = vsel %vm404, %v375, 0
        %650 = vmatprep.subr.mxu0 0.0
        %651 = vmatpush1.msra.mxu0 %v598
        %652 = vmatprep.subr.mxu0 0.0
        %653 = vmatpush1.msra.mxu0 %v599
        %654 = vmatprep.subr.mxu0 0.0
        %655 = vmatpush1.msra.mxu0 %v600
        %656 = vmatprep.subr.mxu0 0.0
        %657 = vmatpush1.msra.mxu0 %v601
        %658 = vmatprep.subr.mxu0 0.0
        %659 = vmatpush1.msra.mxu0 0.0
        %660 = vmatprep.subr.mxu0 0.0
        %661 = vmatpush1.msra.mxu0 0.0
        %662 = vmatprep.subr.mxu0 0.0
        %663 = vmatpush1.msra.mxu0 0.0
        %664 = vmatprep.subr.mxu0 0.0
        %665 = vmatpush1.msra.mxu0 0.0
        %666 = vmatprep.subr.mxu0 0.0
        %667 = vmatpush1.msra.mxu0 0.0
        %668 = vmatprep.subr.mxu0 0.0
        %669 = vmatpush1.msra.mxu0 0.0
        %670 = vmatprep.subr.mxu0 0.0
        %671 = vmatpush1.msra.mxu0 0.0
        %672 = vmatprep.subr.mxu0 0.0
        %673 = vmatpush1.msra.mxu0 0.0
        %674 = vmatprep.subr.mxu0 0.0
        %675 = vmatpush1.msra.mxu0 0.0
        %676 = vmatprep.subr.mxu0 0.0
        %677 = vmatpush1.msra.mxu0 0.0
        %678 = vmatprep.subr.mxu0 0.0
        %679 = vmatpush1.msra.mxu0 0.0
        %680 = vmatprep.subr.mxu0 0.0
        %681 = vmatpush1.msra.mxu0 0.0
        %682 = vmatprep.subr.mxu0 0.0
        %683 = vmatpush1.msra.mxu0 0.0
        %684 = vmatprep.subr.mxu0 0.0
        %685 = vmatpush1.msra.mxu0 0.0
        %686 = vmatprep.subr.mxu0 0.0
        %687 = vmatpush1.msra.mxu0 0.0
        %688 = vmatprep.subr.mxu0 0.0
        %689 = vmatpush1.msra.mxu0 0.0
        %690 = vmatprep.subr.mxu0 0.0
        %691 = vmatpush1.msra.mxu0 0.0
        %692 = vmatprep.subr.mxu0 0.0
        %693 = vmatpush1.msra.mxu0 0.0
        %694 = vmatprep.subr.mxu0 0.0
        %695 = vmatpush1.msra.mxu0 0.0
        %696 = vmatprep.subr.mxu0 0.0
        %697 = vmatpush1.msra.mxu0 0.0
        %698 = vmatprep.subr.mxu0 0.0
        %699 = vmatpush1.msra.mxu0 0.0
        %700 = vmatprep.subr.mxu0 0.0
        %701 = vmatpush1.msra.mxu0 0.0
        %702 = vmatprep.subr.mxu0 0.0
        %703 = vmatpush1.msra.mxu0 0.0
        %704 = vmatprep.subr.mxu0 0.0
        %705 = vmatpush1.msra.mxu0 0.0
        %706 = vmatprep.subr.mxu0 0.0
        %707 = vmatpush1.msra.mxu0 0.0
        %708 = vmatprep.subr.mxu0 0.0
        %709 = vmatpush1.msra.mxu0 0.0
        %710 = vmatprep.subr.mxu0 0.0
        %711 = vmatpush1.msra.mxu0 0.0
        %712 = vmatprep.subr.mxu0 0.0
        %713 = vmatpush1.msra.mxu0 0.0
        %714 = vmatprep.mubr.f32.mxu0 0.0
        %715 = vmatmul.mubr.f32.gmra.mrb[0].mxu0 %v603
        %v716 = vpop.f32.mrb[0].mxu0
        %v717 = vadd.f32 0.0, %v716
        %v718 = vpop.f32.mrb[0].mxu0
        %719 = vmatprep.mubr.f32.mxu0 0.0
        %720 = vmatmul.mubr.f32.gmra.mrb[0].mxu0 %v606
        %v721 = vpop.f32.mrb[0].mxu0
        %v722 = vadd.f32 0.0, %v721
        %v723 = vpop.f32.mrb[0].mxu0
        %724 = vmatprep.mubr.f32.mxu0 0.0
        %725 = vmatmul.mubr.f32.gmra.mrb[0].mxu0 %v609
        %v726 = vpop.f32.mrb[0].mxu0
        %v727 = vadd.f32 0.0, %v726
        %v728 = vpop.f32.mrb[0].mxu0
        %729 = vmatprep.mubr.f32.mxu0 0.0
        %730 = vmatmul.mubr.f32.gmra.mrb[0].mxu0 %v612
        %v731 = vpop.f32.mrb[0].mxu0
        %v732 = vadd.f32 0.0, %v731
        %v733 = vpop.f32.mrb[0].mxu0
        %734 = vmatprep.mubr.f32.mxu0 0.0
        %735 = vmatmul.mubr.f32.gmra.mrb[0].mxu0 %v615
        %v736 = vpop.f32.mrb[0].mxu0
        %v737 = vadd.f32 0.0, %v736
        %v738 = vpop.f32.mrb[0].mxu0
        %739 = vmatprep.mubr.f32.mxu0 0.0
        %740 = vmatmul.mubr.f32.gmra.mrb[0].mxu0 %v618
        %v741 = vpop.f32.mrb[0].mxu0
        %v742 = vadd.f32 0.0, %v741
        %v743 = vpop.f32.mrb[0].mxu0
        %744 = vmatprep.mubr.f32.mxu0 0.0
        %745 = vmatmul.mubr.f32.gmra.mrb[0].mxu0 %v621
        %v746 = vpop.f32.mrb[0].mxu0
        %v747 = vadd.f32 0.0, %v746
        %v748 = vpop.f32.mrb[0].mxu0
        %749 = vmatprep.mubr.f32.mxu0 0.0
        %750 = vmatmul.mubr.f32.gmra.mrb[0].mxu0 %v624
        %v751 = vpop.f32.mrb[0].mxu0
        %v752 = vadd.f32 0.0, %v751
        %v753 = vpop.f32.mrb[0].mxu0
        %754 = vmatprep.mubr.f32.mxu0 0.0
        %755 = vmatmul.mubr.f32.gmra.mrb[0].mxu0 %v627
        %v756 = vpop.f32.mrb[0].mxu0
        %v757 = vadd.f32 0.0, %v756
        %v758 = vpop.f32.mrb[0].mxu0
        %759 = vmatprep.mubr.f32.mxu0 0.0
        %760 = vmatmul.mubr.f32.gmra.mrb[0].mxu0 %v630
        %v761 = vpop.f32.mrb[0].mxu0
        %v762 = vadd.f32 0.0, %v761
        %v763 = vpop.f32.mrb[0].mxu0
        %764 = vmatprep.mubr.f32.mxu0 0.0
        %765 = vmatmul.mubr.f32.gmra.mrb[0].mxu0 %v633
        %v766 = vpop.f32.mrb[0].mxu0
        %v767 = vadd.f32 0.0, %v766
        %v768 = vpop.f32.mrb[0].mxu0
        %769 = vmatprep.mubr.f32.mxu0 0.0
        %770 = vmatmul.mubr.f32.gmra.mrb[0].mxu0 %v636
        %v771 = vpop.f32.mrb[0].mxu0
        %v772 = vadd.f32 0.0, %v771
        %v773 = vpop.f32.mrb[0].mxu0
        %774 = vmatprep.mubr.f32.mxu0 0.0
        %775 = vmatmul.mubr.f32.gmra.mrb[0].mxu0 %v639
        %v776 = vpop.f32.mrb[0].mxu0
        %v777 = vadd.f32 0.0, %v776
        %v778 = vpop.f32.mrb[0].mxu0
        %779 = vmatprep.mubr.f32.mxu0 0.0
        %780 = vmatmul.mubr.f32.gmra.mrb[0].mxu0 %v642
        %v781 = vpop.f32.mrb[0].mxu0
        %v782 = vadd.f32 0.0, %v781
        %v783 = vpop.f32.mrb[0].mxu0
        %784 = vmatprep.mubr.f32.mxu0 0.0
        %785 = vmatmul.mubr.f32.gmra.mrb[0].mxu0 %v645
        %v786 = vpop.f32.mrb[0].mxu0
        %v787 = vadd.f32 0.0, %v786
        %v788 = vpop.f32.mrb[0].mxu0
        %789 = vmatprep.mubr.f32.mxu0 0.0
        %790 = vmatmul.mubr.f32.gmra.mrb[0].mxu0 %v648
        %v791 = vpop.f32.mrb[0].mxu0
        %v792 = vadd.f32 0.0, %v791
        %v793 = vpop.f32.mrb[0].mxu0
        %794 = vdwg.mxu0
        %v795 = vld [vmem:[%s343] sm:$0xff]
        %v796 = vld [vmem:[%s343 + $0x8] sm:$0xff]
        %v797 = vld [vmem:[%s343 + $0x10] sm:$0xff]
        %v798 = vld [vmem:[%s343 + $0x18] sm:$0xff]
        %v800 = vsel %vm404, %v376, 0
        %v803 = vsel %vm404, %v377, 0
        %v806 = vsel %vm404, %v378, 0
        %v809 = vsel %vm404, %v379, 0
        %v812 = vsel %vm404, %v380, 0
        %v815 = vsel %vm404, %v381, 0
        %v818 = vsel %vm404, %v382, 0
        %v821 = vsel %vm404, %v383, 0
        %v824 = vsel %vm404, %v384, 0
        %v827 = vsel %vm404, %v385, 0
        %v830 = vsel %vm404, %v386, 0
        %v833 = vsel %vm404, %v387, 0
        %v836 = vsel %vm404, %v388, 0
        %v839 = vsel %vm404, %v389, 0
        %v842 = vsel %vm404, %v390, 0
        %v845 = vsel %vm404, %v391, 0
        %847 = vmatprep.subr.mxu0 0.0
        %848 = vmatpush1.msra.mxu0 %v795
        %849 = vmatprep.subr.mxu0 0.0
        %850 = vmatpush1.msra.mxu0 %v796
        %851 = vmatprep.subr.mxu0 0.0
        %852 = vmatpush1.msra.mxu0 %v797
        %853 = vmatprep.subr.mxu0 0.0
        %854 = vmatpush1.msra.mxu0 %v798
        %855 = vmatprep.subr.mxu0 0.0
        %856 = vmatpush1.msra.mxu0 0.0
        %857 = vmatprep.subr.mxu0 0.0
        %858 = vmatpush1.msra.mxu0 0.0
        %859 = vmatprep.subr.mxu0 0.0
        %860 = vmatpush1.msra.mxu0 0.0
        %861 = vmatprep.subr.mxu0 0.0
        %862 = vmatpush1.msra.mxu0 0.0
        %863 = vmatprep.subr.mxu0 0.0
        %864 = vmatpush1.msra.mxu0 0.0
        %865 = vmatprep.subr.mxu0 0.0
        %866 = vmatpush1.msra.mxu0 0.0
        %867 = vmatprep.subr.mxu0 0.0
        %868 = vmatpush1.msra.mxu0 0.0
        %869 = vmatprep.subr.mxu0 0.0
        %870 = vmatpush1.msra.mxu0 0.0
        %871 = vmatprep.subr.mxu0 0.0
        %872 = vmatpush1.msra.mxu0 0.0
        %873 = vmatprep.subr.mxu0 0.0
        %874 = vmatpush1.msra.mxu0 0.0
        %875 = vmatprep.subr.mxu0 0.0
        %876 = vmatpush1.msra.mxu0 0.0
        %877 = vmatprep.subr.mxu0 0.0
        %878 = vmatpush1.msra.mxu0 0.0
        %879 = vmatprep.subr.mxu0 0.0
        %880 = vmatpush1.msra.mxu0 0.0
        %881 = vmatprep.subr.mxu0 0.0
        %882 = vmatpush1.msra.mxu0 0.0
        %883 = vmatprep.subr.mxu0 0.0
        %884 = vmatpush1.msra.mxu0 0.0
        %885 = vmatprep.subr.mxu0 0.0
        %886 = vmatpush1.msra.mxu0 0.0
        %887 = vmatprep.subr.mxu0 0.0
        %888 = vmatpush1.msra.mxu0 0.0
        %889 = vmatprep.subr.mxu0 0.0
        %890 = vmatpush1.msra.mxu0 0.0
        %891 = vmatprep.subr.mxu0 0.0
        %892 = vmatpush1.msra.mxu0 0.0
        %893 = vmatprep.subr.mxu0 0.0
        %894 = vmatpush1.msra.mxu0 0.0
        %895 = vmatprep.subr.mxu0 0.0
        %896 = vmatpush1.msra.mxu0 0.0
        %897 = vmatprep.subr.mxu0 0.0
        %898 = vmatpush1.msra.mxu0 0.0
        %899 = vmatprep.subr.mxu0 0.0
        %900 = vmatpush1.msra.mxu0 0.0
        %901 = vmatprep.subr.mxu0 0.0
        %902 = vmatpush1.msra.mxu0 0.0
        %903 = vmatprep.subr.mxu0 0.0
        %904 = vmatpush1.msra.mxu0 0.0
        %905 = vmatprep.subr.mxu0 0.0
        %906 = vmatpush1.msra.mxu0 0.0
        %907 = vmatprep.subr.mxu0 0.0
        %908 = vmatpush1.msra.mxu0 0.0
        %909 = vmatprep.subr.mxu0 0.0
        %910 = vmatpush1.msra.mxu0 0.0
        %911 = vmatprep.mubr.f32.mxu0 0.0
        %912 = vmatmul.mubr.f32.gmra.mrb[0].mxu0 %v800
        %v913 = vpop.f32.mrb[0].mxu0
        %v914 = vadd.f32 0.0, %v913
        %v915 = vpop.f32.mrb[0].mxu0
        %916 = vmatprep.mubr.f32.mxu0 0.0
        %917 = vmatmul.mubr.f32.gmra.mrb[0].mxu0 %v803
        %v918 = vpop.f32.mrb[0].mxu0
        %v919 = vadd.f32 0.0, %v918
        %v920 = vpop.f32.mrb[0].mxu0
        %921 = vmatprep.mubr.f32.mxu0 0.0
        %922 = vmatmul.mubr.f32.gmra.mrb[0].mxu0 %v806
        %v923 = vpop.f32.mrb[0].mxu0
        %v924 = vadd.f32 0.0, %v923
        %v925 = vpop.f32.mrb[0].mxu0
        %926 = vmatprep.mubr.f32.mxu0 0.0
        %927 = vmatmul.mubr.f32.gmra.mrb[0].mxu0 %v809
        %v928 = vpop.f32.mrb[0].mxu0
        %v929 = vadd.f32 0.0, %v928
        %v930 = vpop.f32.mrb[0].mxu0
        %931 = vmatprep.mubr.f32.mxu0 0.0
        %932 = vmatmul.mubr.f32.gmra.mrb[0].mxu0 %v812
        %v933 = vpop.f32.mrb[0].mxu0
        %v934 = vadd.f32 0.0, %v933
        %v935 = vpop.f32.mrb[0].mxu0
        %936 = vmatprep.mubr.f32.mxu0 0.0
        %937 = vmatmul.mubr.f32.gmra.mrb[0].mxu0 %v815
        %v938 = vpop.f32.mrb[0].mxu0
        %v939 = vadd.f32 0.0, %v938
        %v940 = vpop.f32.mrb[0].mxu0
        %941 = vmatprep.mubr.f32.mxu0 0.0
        %942 = vmatmul.mubr.f32.gmra.mrb[0].mxu0 %v818
        %v943 = vpop.f32.mrb[0].mxu0
        %v944 = vadd.f32 0.0, %v943
        %v945 = vpop.f32.mrb[0].mxu0
        %946 = vmatprep.mubr.f32.mxu0 0.0
        %947 = vmatmul.mubr.f32.gmra.mrb[0].mxu0 %v821
        %v948 = vpop.f32.mrb[0].mxu0
        %v949 = vadd.f32 0.0, %v948
        %v950 = vpop.f32.mrb[0].mxu0
        %951 = vmatprep.mubr.f32.mxu0 0.0
        %952 = vmatmul.mubr.f32.gmra.mrb[0].mxu0 %v824
        %v953 = vpop.f32.mrb[0].mxu0
        %v954 = vadd.f32 0.0, %v953
        %v955 = vpop.f32.mrb[0].mxu0
        %956 = vmatprep.mubr.f32.mxu0 0.0
        %957 = vmatmul.mubr.f32.gmra.mrb[0].mxu0 %v827
        %v958 = vpop.f32.mrb[0].mxu0
        %v959 = vadd.f32 0.0, %v958
        %v960 = vpop.f32.mrb[0].mxu0
        %961 = vmatprep.mubr.f32.mxu0 0.0
        %962 = vmatmul.mubr.f32.gmra.mrb[0].mxu0 %v830
        %v963 = vpop.f32.mrb[0].mxu0
        %v964 = vadd.f32 0.0, %v963
        %v965 = vpop.f32.mrb[0].mxu0
        %966 = vmatprep.mubr.f32.mxu0 0.0
        %967 = vmatmul.mubr.f32.gmra.mrb[0].mxu0 %v833
        %v968 = vpop.f32.mrb[0].mxu0
        %v969 = vadd.f32 0.0, %v968
        %v970 = vpop.f32.mrb[0].mxu0
        %971 = vmatprep.mubr.f32.mxu0 0.0
        %972 = vmatmul.mubr.f32.gmra.mrb[0].mxu0 %v836
        %v973 = vpop.f32.mrb[0].mxu0
        %v974 = vadd.f32 0.0, %v973
        %v975 = vpop.f32.mrb[0].mxu0
        %976 = vmatprep.mubr.f32.mxu0 0.0
        %977 = vmatmul.mubr.f32.gmra.mrb[0].mxu0 %v839
        %v978 = vpop.f32.mrb[0].mxu0
        %v979 = vadd.f32 0.0, %v978
        %v980 = vpop.f32.mrb[0].mxu0
        %981 = vmatprep.mubr.f32.mxu0 0.0
        %982 = vmatmul.mubr.f32.gmra.mrb[0].mxu0 %v842
        %v983 = vpop.f32.mrb[0].mxu0
        %v984 = vadd.f32 0.0, %v983
        %v985 = vpop.f32.mrb[0].mxu0
        %986 = vmatprep.mubr.f32.mxu0 0.0
        %987 = vmatmul.mubr.f32.gmra.mrb[0].mxu0 %v845
        %v988 = vpop.f32.mrb[0].mxu0
        %v989 = vadd.f32 0.0, %v988
        %v990 = vpop.f32.mrb[0].mxu0
        %991 = vdwg.mxu0
        %v992 = vmax.f32 %v520, %v525
        %v993 = vmax.f32 %v530, %v535
        %v994 = vmax.f32 %v992, %v993
        %v995 = vrot.slane %v994, 4
        %v996 = vmax.f32 %v994, %v995
        %v997 = vrot.slane %v996, 2
        %v998 = vmax.f32 %v996, %v997
        %v999 = vrot.slane %v998, 1
        %v1000 = vmax.f32 %v998, %v999
        %v1001 = vsub.f32 %v520, %v1000
        %v1002 = vsub.f32 %v525, %v1000
        %v1003 = vsub.f32 %v530, %v1000
        %v1004 = vsub.f32 %v535, %v1000
        %v1005 = vmul.f32 %v1001, 1.442695
        %v1006 = vpow.pop %v1005
        %v1007 = vmul.f32 %v1002, 1.442695
        %v1008 = vpow.pop %v1007
        %v1009 = vmul.f32 %v1003, 1.442695
        %v1010 = vpow.pop %v1009
        %v1011 = vmul.f32 %v1004, 1.442695
        %v1012 = vpow.pop %v1011
        %v1013 = vadd.f32 %v1006, %v1008
        %v1014 = vadd.f32 %v1013, %v1010
        %v1015 = vadd.f32 %v1014, %v1012
        %v1016 = vrot.slane %v1015, 4
        %v1017 = vadd.f32 %v1015, %v1016
        %v1018 = vrot.slane %v1017, 2
        %v1019 = vadd.f32 %v1017, %v1018
        %v1020 = vrot.slane %v1019, 1
        %v1021 = vadd.f32 %v1019, %v1020
        %v1022 = vrcp.pop %v1021
        %v1023 = vmul.f32 %v1006, %v1022
        %v1024 = vmul.f32 %v1008, %v1022
        %v1025 = vmul.f32 %v1010, %v1022
        %v1026 = vmul.f32 %v1012, %v1022
        %1027 = vmax.xlane.f32.xlu0 %v717
        %v1028 = vpop.xlane.xlu0 %1027
        %1029 = vmax.xlane.f32.xlu0 %v722
        %v1030 = vpop.xlane.xlu0 %1029
        %1031 = vmax.xlane.f32.xlu0 %v727
        %v1032 = vpop.xlane.xlu0 %1031
        %1033 = vmax.xlane.f32.xlu0 %v732
        %v1034 = vpop.xlane.xlu0 %1033
        %v1035 = vsub.f32 %v717, %v1028
        %v1036 = vsub.f32 %v722, %v1030
        %v1037 = vsub.f32 %v727, %v1032
        %v1038 = vsub.f32 %v732, %v1034
        %v1039 = vmul.f32 %v1035, 1.442695
        %v1040 = vpow.pop %v1039
        %v1041 = vmul.f32 %v1036, 1.442695
        %v1042 = vpow.pop %v1041
        %v1043 = vmul.f32 %v1037, 1.442695
        %v1044 = vpow.pop %v1043
        %v1045 = vmul.f32 %v1038, 1.442695
        %v1046 = vpow.pop %v1045
        %1047 = vadd.xlane.f32.xlu0 %v1040
        %v1048 = vpop.xlane.xlu0 %1047
        %1049 = vadd.xlane.f32.xlu0 %v1042
        %v1050 = vpop.xlane.xlu0 %1049
        %1051 = vadd.xlane.f32.xlu0 %v1044
        %v1052 = vpop.xlane.xlu0 %1051
        %1053 = vadd.xlane.f32.xlu0 %v1046
        %v1054 = vpop.xlane.xlu0 %1053
        %v1055 = vrcp.pop %v1048
        %v1056 = vrcp.pop %v1050
        %v1057 = vrcp.pop %v1052
        %v1058 = vrcp.pop %v1054
        %v1059 = vmul.f32 %v1040, %v1055
        %v1060 = vmul.f32 %v1042, %v1056
        %v1061 = vmul.f32 %v1044, %v1057
        %v1062 = vmul.f32 %v1046, %v1058
        %1063 = vmatprep.subr.mxu0 0.0
        %1064 = vmatpush1.xpose.msra.mxu0 %v1059
        %1065 = vmatprep.subr.mxu0 0.0
        %1066 = vmatpush1.xpose.msra.mxu0 %v1060
        %1067 = vmatprep.subr.mxu0 0.0
        %1068 = vmatpush1.xpose.msra.mxu0 %v1061
        %1069 = vmatprep.subr.mxu0 0.0
        %1070 = vmatpush1.xpose.msra.mxu0 %v1062
        %1071 = vmatprep.subr.mxu0 0.0
        %1072 = vmatpush1.xpose.msra.mxu0 0.0
        %1073 = vmatprep.subr.mxu0 0.0
        %1074 = vmatpush1.xpose.msra.mxu0 0.0
        %1075 = vmatprep.subr.mxu0 0.0
        %1076 = vmatpush1.xpose.msra.mxu0 0.0
        %1077 = vmatprep.subr.mxu0 0.0
        %1078 = vmatpush1.xpose.msra.mxu0 0.0
        %1079 = vmatprep.subr.mxu0 0.0
        %1080 = vmatpush1.xpose.msra.mxu0 0.0
        %1081 = vmatprep.subr.mxu0 0.0
        %1082 = vmatpush1.xpose.msra.mxu0 0.0
        %1083 = vmatprep.subr.mxu0 0.0
        %1084 = vmatpush1.xpose.msra.mxu0 0.0
        %1085 = vmatprep.subr.mxu0 0.0
        %1086 = vmatpush1.xpose.msra.mxu0 0.0
        %1087 = vmatprep.subr.mxu0 0.0
        %1088 = vmatpush1.xpose.msra.mxu0 0.0
        %1089 = vmatprep.subr.mxu0 0.0
        %1090 = vmatpush1.xpose.msra.mxu0 0.0
        %1091 = vmatprep.subr.mxu0 0.0
        %1092 = vmatpush1.xpose.msra.mxu0 0.0
        %1093 = vmatprep.subr.mxu0 0.0
        %1094 = vmatpush1.xpose.msra.mxu0 0.0
        %1095 = vmatprep.subr.mxu0 0.0
        %1096 = vmatpush1.xpose.msra.mxu0 0.0
        %1097 = vmatprep.subr.mxu0 0.0
        %1098 = vmatpush1.xpose.msra.mxu0 0.0
        %1099 = vmatprep.subr.mxu0 0.0
        %1100 = vmatpush1.xpose.msra.mxu0 0.0
        %1101 = vmatprep.subr.mxu0 0.0
        %1102 = vmatpush1.xpose.msra.mxu0 0.0
        %1103 = vmatprep.subr.mxu0 0.0
        %1104 = vmatpush1.xpose.msra.mxu0 0.0
        %1105 = vmatprep.subr.mxu0 0.0
        %1106 = vmatpush1.xpose.msra.mxu0 0.0
        %1107 = vmatprep.subr.mxu0 0.0
        %1108 = vmatpush1.xpose.msra.mxu0 0.0
        %1109 = vmatprep.subr.mxu0 0.0
        %1110 = vmatpush1.xpose.msra.mxu0 0.0
        %1111 = vmatprep.subr.mxu0 0.0
        %1112 = vmatpush1.xpose.msra.mxu0 0.0
        %1113 = vmatprep.subr.mxu0 0.0
        %1114 = vmatpush1.xpose.msra.mxu0 0.0
        %1115 = vmatprep.subr.mxu0 0.0
        %1116 = vmatpush1.xpose.msra.mxu0 0.0
        %1117 = vmatprep.subr.mxu0 0.0
        %1118 = vmatpush1.xpose.msra.mxu0 0.0
        %1119 = vmatprep.subr.mxu0 0.0
        %1120 = vmatpush1.xpose.msra.mxu0 0.0
        %1121 = vmatprep.subr.mxu0 0.0
        %1122 = vmatpush1.xpose.msra.mxu0 0.0
        %1123 = vmatprep.subr.mxu0 0.0
        %1124 = vmatpush1.xpose.msra.mxu0 0.0
        %1125 = vmatprep.subr.mxu0 0.0
        %1126 = vmatpush1.xpose.msra.mxu0 0.0
        %1127 = vmatprep.mubr.f32.mxu0 0.0
        %1128 = vmatmul.mubr.f32.gmra.mrb[0].mxu0 %v914
        %v1129 = vpop.f32.mrb[0].mxu0
        %v1130 = vadd.f32 0.0, %v1129
        %v1131 = vpop.f32.mrb[0].mxu0
        %1132 = vmatprep.mubr.f32.mxu0 0.0
        %1133 = vmatmul.mubr.f32.gmra.mrb[0].mxu0 %v919
        %v1134 = vpop.f32.mrb[0].mxu0
        %v1135 = vadd.f32 0.0, %v1134
        %v1136 = vpop.f32.mrb[0].mxu0
        %1137 = vmatprep.mubr.f32.mxu0 0.0
        %1138 = vmatmul.mubr.f32.gmra.mrb[0].mxu0 %v924
        %v1139 = vpop.f32.mrb[0].mxu0
        %v1140 = vadd.f32 0.0, %v1139
        %v1141 = vpop.f32.mrb[0].mxu0
        %1142 = vmatprep.mubr.f32.mxu0 0.0
        %1143 = vmatmul.mubr.f32.gmra.mrb[0].mxu0 %v929
        %v1144 = vpop.f32.mrb[0].mxu0
        %v1145 = vadd.f32 0.0, %v1144
        %v1146 = vpop.f32.mrb[0].mxu0
        %1147 = vdwg.mxu0
        %v1148 = vmul.f32 %v1130, 0.17677669
        %v1149 = vmul.f32 %v1135, 0.17677669
        %v1150 = vmul.f32 %v1140, 0.17677669
        %v1151 = vmul.f32 %v1145, 0.17677669
        %v1153 = vsel %vm404, %v1148, 0
        %v1156 = vsel %vm404, %v1149, 0
        %v1159 = vsel %vm404, %v1150, 0
        %v1162 = vsel %vm404, %v1151, 0
        %1164 = vmatprep.subr.mxu0 0.0
        %1165 = vmatpush1.msra.mxu0 %v1023
        %1166 = vmatprep.subr.mxu0 0.0
        %1167 = vmatpush1.msra.mxu0 %v1024
        %1168 = vmatprep.subr.mxu0 0.0
        %1169 = vmatpush1.msra.mxu0 %v1025
        %1170 = vmatprep.subr.mxu0 0.0
        %1171 = vmatpush1.msra.mxu0 %v1026
        %1172 = vmatprep.subr.mxu0 0.0
        %1173 = vmatpush1.msra.mxu0 0.0
        %1174 = vmatprep.subr.mxu0 0.0
        %1175 = vmatpush1.msra.mxu0 0.0
        %1176 = vmatprep.subr.mxu0 0.0
        %1177 = vmatpush1.msra.mxu0 0.0
        %1178 = vmatprep.subr.mxu0 0.0
        %1179 = vmatpush1.msra.mxu0 0.0
        %1180 = vmatprep.subr.mxu0 0.0
        %1181 = vmatpush1.msra.mxu0 0.0
        %1182 = vmatprep.subr.mxu0 0.0
        %1183 = vmatpush1.msra.mxu0 0.0
        %1184 = vmatprep.subr.mxu0 0.0
        %1185 = vmatpush1.msra.mxu0 0.0
        %1186 = vmatprep.subr.mxu0 0.0
        %1187 = vmatpush1.msra.mxu0 0.0
        %1188 = vmatprep.subr.mxu0 0.0
        %1189 = vmatpush1.msra.mxu0 0.0
        %1190 = vmatprep.subr.mxu0 0.0
        %1191 = vmatpush1.msra.mxu0 0.0
        %1192 = vmatprep.subr.mxu0 0.0
        %1193 = vmatpush1.msra.mxu0 0.0
        %1194 = vmatprep.subr.mxu0 0.0
        %1195 = vmatpush1.msra.mxu0 0.0
        %1196 = vmatprep.subr.mxu0 0.0
        %1197 = vmatpush1.msra.mxu0 0.0
        %1198 = vmatprep.subr.mxu0 0.0
        %1199 = vmatpush1.msra.mxu0 0.0
        %1200 = vmatprep.subr.mxu0 0.0
        %1201 = vmatpush1.msra.mxu0 0.0
        %1202 = vmatprep.subr.mxu0 0.0
        %1203 = vmatpush1.msra.mxu0 0.0
        %1204 = vmatprep.subr.mxu0 0.0
        %1205 = vmatpush1.msra.mxu0 0.0
        %1206 = vmatprep.subr.mxu0 0.0
        %1207 = vmatpush1.msra.mxu0 0.0
        %1208 = vmatprep.subr.mxu0 0.0
        %1209 = vmatpush1.msra.mxu0 0.0
        %1210 = vmatprep.subr.mxu0 0.0
        %1211 = vmatpush1.msra.mxu0 0.0
        %1212 = vmatprep.subr.mxu0 0.0
        %1213 = vmatpush1.msra.mxu0 0.0
        %1214 = vmatprep.subr.mxu0 0.0
        %1215 = vmatpush1.msra.mxu0 0.0
        %1216 = vmatprep.subr.mxu0 0.0
        %1217 = vmatpush1.msra.mxu0 0.0
        %1218 = vmatprep.subr.mxu0 0.0
        %1219 = vmatpush1.msra.mxu0 0.0
        %1220 = vmatprep.subr.mxu0 0.0
        %1221 = vmatpush1.msra.mxu0 0.0
        %1222 = vmatprep.subr.mxu0 0.0
        %1223 = vmatpush1.msra.mxu0 0.0
        %1224 = vmatprep.subr.mxu0 0.0
        %1225 = vmatpush1.msra.mxu0 0.0
        %1226 = vmatprep.subr.mxu0 0.0
        %1227 = vmatpush1.msra.mxu0 0.0
        %1228 = vmatprep.mubr.f32.mxu0 0.0
        %1229 = vmatmul.mubr.f32.gmra.mrb[0].mxu0 %v1153
        %v1230 = vpop.f32.mrb[0].mxu0
        %v1231 = vadd.f32 0.0, %v1230
        %v1232 = vpop.f32.mrb[0].mxu0
        %1233 = vmatprep.mubr.f32.mxu0 0.0
        %1234 = vmatmul.mubr.f32.gmra.mrb[0].mxu0 %v1156
        %v1235 = vpop.f32.mrb[0].mxu0
        %v1236 = vadd.f32 0.0, %v1235
        %v1237 = vpop.f32.mrb[0].mxu0
        %1238 = vmatprep.mubr.f32.mxu0 0.0
        %1239 = vmatmul.mubr.f32.gmra.mrb[0].mxu0 %v1159
        %v1240 = vpop.f32.mrb[0].mxu0
        %v1241 = vadd.f32 0.0, %v1240
        %v1242 = vpop.f32.mrb[0].mxu0
        %1243 = vmatprep.mubr.f32.mxu0 0.0
        %1244 = vmatmul.mubr.f32.gmra.mrb[0].mxu0 %v1162
        %v1245 = vpop.f32.mrb[0].mxu0
        %v1246 = vadd.f32 0.0, %v1245
        %v1247 = vpop.f32.mrb[0].mxu0
        %1248 = vdwg.mxu0
        %v1249 = vmax.f32 %v540, %v545
        %v1250 = vmax.f32 %v550, %v555
        %v1251 = vmax.f32 %v1249, %v1250
        %v1252 = vrot.slane %v1251, 4
        %v1253 = vmax.f32 %v1251, %v1252
        %v1254 = vrot.slane %v1253, 2
        %v1255 = vmax.f32 %v1253, %v1254
        %v1256 = vrot.slane %v1255, 1
        %v1257 = vmax.f32 %v1255, %v1256
        %v1258 = vsub.f32 %v540, %v1257
        %v1259 = vsub.f32 %v545, %v1257
        %v1260 = vsub.f32 %v550, %v1257
        %v1261 = vsub.f32 %v555, %v1257
        %v1262 = vmul.f32 %v1258, 1.442695
        %v1263 = vpow.pop %v1262
        %v1264 = vmul.f32 %v1259, 1.442695
        %v1265 = vpow.pop %v1264
        %v1266 = vmul.f32 %v1260, 1.442695
        %v1267 = vpow.pop %v1266
        %v1268 = vmul.f32 %v1261, 1.442695
        %v1269 = vpow.pop %v1268
        %v1270 = vadd.f32 %v1263, %v1265
        %v1271 = vadd.f32 %v1270, %v1267
        %v1272 = vadd.f32 %v1271, %v1269
        %v1273 = vrot.slane %v1272, 4
        %v1274 = vadd.f32 %v1272, %v1273
        %v1275 = vrot.slane %v1274, 2
        %v1276 = vadd.f32 %v1274, %v1275
        %v1277 = vrot.slane %v1276, 1
        %v1278 = vadd.f32 %v1276, %v1277
        %v1279 = vrcp.pop %v1278
        %v1280 = vmul.f32 %v1263, %v1279
        %v1281 = vmul.f32 %v1265, %v1279
        %v1282 = vmul.f32 %v1267, %v1279
        %v1283 = vmul.f32 %v1269, %v1279
        %1284 = vmax.xlane.f32.xlu0 %v737
        %v1285 = vpop.xlane.xlu0 %1284
        %1286 = vmax.xlane.f32.xlu0 %v742
        %v1287 = vpop.xlane.xlu0 %1286
        %1288 = vmax.xlane.f32.xlu0 %v747
        %v1289 = vpop.xlane.xlu0 %1288
        %1290 = vmax.xlane.f32.xlu0 %v752
        %v1291 = vpop.xlane.xlu0 %1290
        %v1292 = vsub.f32 %v737, %v1285
        %v1293 = vsub.f32 %v742, %v1287
        %v1294 = vsub.f32 %v747, %v1289
        %v1295 = vsub.f32 %v752, %v1291
        %v1296 = vmul.f32 %v1292, 1.442695
        %v1297 = vpow.pop %v1296
        %v1298 = vmul.f32 %v1293, 1.442695
        %v1299 = vpow.pop %v1298
        %v1300 = vmul.f32 %v1294, 1.442695
        %v1301 = vpow.pop %v1300
        %v1302 = vmul.f32 %v1295, 1.442695
        %v1303 = vpow.pop %v1302
        %1304 = vadd.xlane.f32.xlu0 %v1297
        %v1305 = vpop.xlane.xlu0 %1304
        %1306 = vadd.xlane.f32.xlu0 %v1299
        %v1307 = vpop.xlane.xlu0 %1306
        %1308 = vadd.xlane.f32.xlu0 %v1301
        %v1309 = vpop.xlane.xlu0 %1308
        %1310 = vadd.xlane.f32.xlu0 %v1303
        %v1311 = vpop.xlane.xlu0 %1310
        %v1312 = vrcp.pop %v1305
        %v1313 = vrcp.pop %v1307
        %v1314 = vrcp.pop %v1309
        %v1315 = vrcp.pop %v1311
        %v1316 = vmul.f32 %v1297, %v1312
        %v1317 = vmul.f32 %v1299, %v1313
        %v1318 = vmul.f32 %v1301, %v1314
        %v1319 = vmul.f32 %v1303, %v1315
        %1320 = vmatprep.subr.mxu0 0.0
        %1321 = vmatpush1.xpose.msra.mxu0 %v1316
        %1322 = vmatprep.subr.mxu0 0.0
        %1323 = vmatpush1.xpose.msra.mxu0 %v1317
        %1324 = vmatprep.subr.mxu0 0.0
        %1325 = vmatpush1.xpose.msra.mxu0 %v1318
        %1326 = vmatprep.subr.mxu0 0.0
        %1327 = vmatpush1.xpose.msra.mxu0 %v1319
        %1328 = vmatprep.subr.mxu0 0.0
        %1329 = vmatpush1.xpose.msra.mxu0 0.0
        %1330 = vmatprep.subr.mxu0 0.0
        %1331 = vmatpush1.xpose.msra.mxu0 0.0
        %1332 = vmatprep.subr.mxu0 0.0
        %1333 = vmatpush1.xpose.msra.mxu0 0.0
        %1334 = vmatprep.subr.mxu0 0.0
        %1335 = vmatpush1.xpose.msra.mxu0 0.0
        %1336 = vmatprep.subr.mxu0 0.0
        %1337 = vmatpush1.xpose.msra.mxu0 0.0
        %1338 = vmatprep.subr.mxu0 0.0
        %1339 = vmatpush1.xpose.msra.mxu0 0.0
        %1340 = vmatprep.subr.mxu0 0.0
        %1341 = vmatpush1.xpose.msra.mxu0 0.0
        %1342 = vmatprep.subr.mxu0 0.0
        %1343 = vmatpush1.xpose.msra.mxu0 0.0
        %1344 = vmatprep.subr.mxu0 0.0
        %1345 = vmatpush1.xpose.msra.mxu0 0.0
        %1346 = vmatprep.subr.mxu0 0.0
        %1347 = vmatpush1.xpose.msra.mxu0 0.0
        %1348 = vmatprep.subr.mxu0 0.0
        %1349 = vmatpush1.xpose.msra.mxu0 0.0
        %1350 = vmatprep.subr.mxu0 0.0
        %1351 = vmatpush1.xpose.msra.mxu0 0.0
        %1352 = vmatprep.subr.mxu0 0.0
        %1353 = vmatpush1.xpose.msra.mxu0 0.0
        %1354 = vmatprep.subr.mxu0 0.0
        %1355 = vmatpush1.xpose.msra.mxu0 0.0
        %1356 = vmatprep.subr.mxu0 0.0
        %1357 = vmatpush1.xpose.msra.mxu0 0.0
        %1358 = vmatprep.subr.mxu0 0.0
        %1359 = vmatpush1.xpose.msra.mxu0 0.0
        %1360 = vmatprep.subr.mxu0 0.0
        %1361 = vmatpush1.xpose.msra.mxu0 0.0
        %1362 = vmatprep.subr.mxu0 0.0
        %1363 = vmatpush1.xpose.msra.mxu0 0.0
        %1364 = vmatprep.subr.mxu0 0.0
        %1365 = vmatpush1.xpose.msra.mxu0 0.0
        %1366 = vmatprep.subr.mxu0 0.0
        %1367 = vmatpush1.xpose.msra.mxu0 0.0
        %1368 = vmatprep.subr.mxu0 0.0
        %1369 = vmatpush1.xpose.msra.mxu0 0.0
        %1370 = vmatprep.subr.mxu0 0.0
        %1371 = vmatpush1.xpose.msra.mxu0 0.0
        %1372 = vmatprep.subr.mxu0 0.0
        %1373 = vmatpush1.xpose.msra.mxu0 0.0
        %1374 = vmatprep.subr.mxu0 0.0
        %1375 = vmatpush1.xpose.msra.mxu0 0.0
        %1376 = vmatprep.subr.mxu0 0.0
        %1377 = vmatpush1.xpose.msra.mxu0 0.0
        %1378 = vmatprep.subr.mxu0 0.0
        %1379 = vmatpush1.xpose.msra.mxu0 0.0
        %1380 = vmatprep.subr.mxu0 0.0
        %1381 = vmatpush1.xpose.msra.mxu0 0.0
        %1382 = vmatprep.subr.mxu0 0.0
        %1383 = vmatpush1.xpose.msra.mxu0 0.0
        %1384 = vmatprep.mubr.f32.mxu0 0.0
        %1385 = vmatmul.mubr.f32.gmra.mrb[0].mxu0 %v934
        %v1386 = vpop.f32.mrb[0].mxu0
        %v1387 = vadd.f32 0.0, %v1386
        %v1388 = vpop.f32.mrb[0].mxu0
        %1389 = vmatprep.mubr.f32.mxu0 0.0
        %1390 = vmatmul.mubr.f32.gmra.mrb[0].mxu0 %v939
        %v1391 = vpop.f32.mrb[0].mxu0
        %v1392 = vadd.f32 0.0, %v1391
        %v1393 = vpop.f32.mrb[0].mxu0
        %1394 = vmatprep.mubr.f32.mxu0 0.0
        %1395 = vmatmul.mubr.f32.gmra.mrb[0].mxu0 %v944
        %v1396 = vpop.f32.mrb[0].mxu0
        %v1397 = vadd.f32 0.0, %v1396
        %v1398 = vpop.f32.mrb[0].mxu0
        %1399 = vmatprep.mubr.f32.mxu0 0.0
        %1400 = vmatmul.mubr.f32.gmra.mrb[0].mxu0 %v949
        %v1401 = vpop.f32.mrb[0].mxu0
        %v1402 = vadd.f32 0.0, %v1401
        %v1403 = vpop.f32.mrb[0].mxu0
        %1404 = vdwg.mxu0
        %v1405 = vmul.f32 %v1387, 0.17677669
        %v1406 = vmul.f32 %v1392, 0.17677669
        %v1407 = vmul.f32 %v1397, 0.17677669
        %v1408 = vmul.f32 %v1402, 0.17677669
        %v1410 = vsel %vm404, %v1405, 0
        %v1413 = vsel %vm404, %v1406, 0
        %v1416 = vsel %vm404, %v1407, 0
        %v1419 = vsel %vm404, %v1408, 0
        %1421 = vmatprep.subr.mxu0 0.0
        %1422 = vmatpush1.msra.mxu0 %v1280
        %1423 = vmatprep.subr.mxu0 0.0
        %1424 = vmatpush1.msra.mxu0 %v1281
        %1425 = vmatprep.subr.mxu0 0.0
        %1426 = vmatpush1.msra.mxu0 %v1282
        %1427 = vmatprep.subr.mxu0 0.0
        %1428 = vmatpush1.msra.mxu0 %v1283
        %1429 = vmatprep.subr.mxu0 0.0
        %1430 = vmatpush1.msra.mxu0 0.0
        %1431 = vmatprep.subr.mxu0 0.0
        %1432 = vmatpush1.msra.mxu0 0.0
        %1433 = vmatprep.subr.mxu0 0.0
        %1434 = vmatpush1.msra.mxu0 0.0
        %1435 = vmatprep.subr.mxu0 0.0
        %1436 = vmatpush1.msra.mxu0 0.0
        %1437 = vmatprep.subr.mxu0 0.0
        %1438 = vmatpush1.msra.mxu0 0.0
        %1439 = vmatprep.subr.mxu0 0.0
        %1440 = vmatpush1.msra.mxu0 0.0
        %1441 = vmatprep.subr.mxu0 0.0
        %1442 = vmatpush1.msra.mxu0 0.0
        %1443 = vmatprep.subr.mxu0 0.0
        %1444 = vmatpush1.msra.mxu0 0.0
        %1445 = vmatprep.subr.mxu0 0.0
        %1446 = vmatpush1.msra.mxu0 0.0
        %1447 = vmatprep.subr.mxu0 0.0
        %1448 = vmatpush1.msra.mxu0 0.0
        %1449 = vmatprep.subr.mxu0 0.0
        %1450 = vmatpush1.msra.mxu0 0.0
        %1451 = vmatprep.subr.mxu0 0.0
        %1452 = vmatpush1.msra.mxu0 0.0
        %1453 = vmatprep.subr.mxu0 0.0
        %1454 = vmatpush1.msra.mxu0 0.0
        %1455 = vmatprep.subr.mxu0 0.0
        %1456 = vmatpush1.msra.mxu0 0.0
        %1457 = vmatprep.subr.mxu0 0.0
        %1458 = vmatpush1.msra.mxu0 0.0
        %1459 = vmatprep.subr.mxu0 0.0
        %1460 = vmatpush1.msra.mxu0 0.0
        %1461 = vmatprep.subr.mxu0 0.0
        %1462 = vmatpush1.msra.mxu0 0.0
        %1463 = vmatprep.subr.mxu0 0.0
        %1464 = vmatpush1.msra.mxu0 0.0
        %1465 = vmatprep.subr.mxu0 0.0
        %1466 = vmatpush1.msra.mxu0 0.0
        %1467 = vmatprep.subr.mxu0 0.0
        %1468 = vmatpush1.msra.mxu0 0.0
        %1469 = vmatprep.subr.mxu0 0.0
        %1470 = vmatpush1.msra.mxu0 0.0
        %1471 = vmatprep.subr.mxu0 0.0
        %1472 = vmatpush1.msra.mxu0 0.0
        %1473 = vmatprep.subr.mxu0 0.0
        %1474 = vmatpush1.msra.mxu0 0.0
        %1475 = vmatprep.subr.mxu0 0.0
        %1476 = vmatpush1.msra.mxu0 0.0
        %1477 = vmatprep.subr.mxu0 0.0
        %1478 = vmatpush1.msra.mxu0 0.0
        %1479 = vmatprep.subr.mxu0 0.0
        %1480 = vmatpush1.msra.mxu0 0.0
        %1481 = vmatprep.subr.mxu0 0.0
        %1482 = vmatpush1.msra.mxu0 0.0
        %1483 = vmatprep.subr.mxu0 0.0
        %1484 = vmatpush1.msra.mxu0 0.0
        %1485 = vmatprep.mubr.f32.mxu0 0.0
        %1486 = vmatmul.mubr.f32.gmra.mrb[0].mxu0 %v1410
        %v1487 = vpop.f32.mrb[0].mxu0
        %v1488 = vadd.f32 0.0, %v1487
        %v1489 = vpop.f32.mrb[0].mxu0
        %1490 = vmatprep.mubr.f32.mxu0 0.0
        %1491 = vmatmul.mubr.f32.gmra.mrb[0].mxu0 %v1413
        %v1492 = vpop.f32.mrb[0].mxu0
        %v1493 = vadd.f32 0.0, %v1492
        %v1494 = vpop.f32.mrb[0].mxu0
        %1495 = vmatprep.mubr.f32.mxu0 0.0
        %1496 = vmatmul.mubr.f32.gmra.mrb[0].mxu0 %v1416
        %v1497 = vpop.f32.mrb[0].mxu0
        %v1498 = vadd.f32 0.0, %v1497
        %v1499 = vpop.f32.mrb[0].mxu0
        %1500 = vmatprep.mubr.f32.mxu0 0.0
        %1501 = vmatmul.mubr.f32.gmra.mrb[0].mxu0 %v1419
        %v1502 = vpop.f32.mrb[0].mxu0
        %v1503 = vadd.f32 0.0, %v1502
        %v1504 = vpop.f32.mrb[0].mxu0
        %1505 = vdwg.mxu0
        %v1506 = vmax.f32 %v560, %v565
        %v1507 = vmax.f32 %v570, %v575
        %v1508 = vmax.f32 %v1506, %v1507
        %v1509 = vrot.slane %v1508, 4
        %v1510 = vmax.f32 %v1508, %v1509
        %v1511 = vrot.slane %v1510, 2
        %v1512 = vmax.f32 %v1510, %v1511
        %v1513 = vrot.slane %v1512, 1
        %v1514 = vmax.f32 %v1512, %v1513
        %v1515 = vsub.f32 %v560, %v1514
        %v1516 = vsub.f32 %v565, %v1514
        %v1517 = vsub.f32 %v570, %v1514
        %v1518 = vsub.f32 %v575, %v1514
        %v1519 = vmul.f32 %v1515, 1.442695
        %v1520 = vpow.pop %v1519
        %v1521 = vmul.f32 %v1516, 1.442695
        %v1522 = vpow.pop %v1521
        %v1523 = vmul.f32 %v1517, 1.442695
        %v1524 = vpow.pop %v1523
        %v1525 = vmul.f32 %v1518, 1.442695
        %v1526 = vpow.pop %v1525
        %v1527 = vadd.f32 %v1520, %v1522
        %v1528 = vadd.f32 %v1527, %v1524
        %v1529 = vadd.f32 %v1528, %v1526
        %v1530 = vrot.slane %v1529, 4
        %v1531 = vadd.f32 %v1529, %v1530
        %v1532 = vrot.slane %v1531, 2
        %v1533 = vadd.f32 %v1531, %v1532
        %v1534 = vrot.slane %v1533, 1
        %v1535 = vadd.f32 %v1533, %v1534
        %v1536 = vrcp.pop %v1535
        %v1537 = vmul.f32 %v1520, %v1536
        %v1538 = vmul.f32 %v1522, %v1536
        %v1539 = vmul.f32 %v1524, %v1536
        %v1540 = vmul.f32 %v1526, %v1536
        %1541 = vmax.xlane.f32.xlu0 %v757
        %v1542 = vpop.xlane.xlu0 %1541
        %1543 = vmax.xlane.f32.xlu0 %v762
        %v1544 = vpop.xlane.xlu0 %1543
        %1545 = vmax.xlane.f32.xlu0 %v767
        %v1546 = vpop.xlane.xlu0 %1545
        %1547 = vmax.xlane.f32.xlu0 %v772
        %v1548 = vpop.xlane.xlu0 %1547
        %v1549 = vsub.f32 %v757, %v1542
        %v1550 = vsub.f32 %v762, %v1544
        %v1551 = vsub.f32 %v767, %v1546
        %v1552 = vsub.f32 %v772, %v1548
        %v1553 = vmul.f32 %v1549, 1.442695
        %v1554 = vpow.pop %v1553
        %v1555 = vmul.f32 %v1550, 1.442695
        %v1556 = vpow.pop %v1555
        %v1557 = vmul.f32 %v1551, 1.442695
        %v1558 = vpow.pop %v1557
        %v1559 = vmul.f32 %v1552, 1.442695
        %v1560 = vpow.pop %v1559
        %1561 = vadd.xlane.f32.xlu0 %v1554
        %v1562 = vpop.xlane.xlu0 %1561
        %1563 = vadd.xlane.f32.xlu0 %v1556
        %v1564 = vpop.xlane.xlu0 %1563
        %1565 = vadd.xlane.f32.xlu0 %v1558
        %v1566 = vpop.xlane.xlu0 %1565
        %1567 = vadd.xlane.f32.xlu0 %v1560
        %v1568 = vpop.xlane.xlu0 %1567
        %v1569 = vrcp.pop %v1562
        %v1570 = vrcp.pop %v1564
        %v1571 = vrcp.pop %v1566
        %v1572 = vrcp.pop %v1568
        %v1573 = vmul.f32 %v1554, %v1569
        %v1574 = vmul.f32 %v1556, %v1570
        %v1575 = vmul.f32 %v1558, %v1571
        %v1576 = vmul.f32 %v1560, %v1572
        %1577 = vmatprep.subr.mxu0 0.0
        %1578 = vmatpush1.xpose.msra.mxu0 %v1573
        %1579 = vmatprep.subr.mxu0 0.0
        %1580 = vmatpush1.xpose.msra.mxu0 %v1574
        %1581 = vmatprep.subr.mxu0 0.0
        %1582 = vmatpush1.xpose.msra.mxu0 %v1575
        %1583 = vmatprep.subr.mxu0 0.0
        %1584 = vmatpush1.xpose.msra.mxu0 %v1576
        %1585 = vmatprep.subr.mxu0 0.0
        %1586 = vmatpush1.xpose.msra.mxu0 0.0
        %1587 = vmatprep.subr.mxu0 0.0
        %1588 = vmatpush1.xpose.msra.mxu0 0.0
        %1589 = vmatprep.subr.mxu0 0.0
        %1590 = vmatpush1.xpose.msra.mxu0 0.0
        %1591 = vmatprep.subr.mxu0 0.0
        %1592 = vmatpush1.xpose.msra.mxu0 0.0
        %1593 = vmatprep.subr.mxu0 0.0
        %1594 = vmatpush1.xpose.msra.mxu0 0.0
        %1595 = vmatprep.subr.mxu0 0.0
        %1596 = vmatpush1.xpose.msra.mxu0 0.0
        %1597 = vmatprep.subr.mxu0 0.0
        %1598 = vmatpush1.xpose.msra.mxu0 0.0
        %1599 = vmatprep.subr.mxu0 0.0
        %1600 = vmatpush1.xpose.msra.mxu0 0.0
        %1601 = vmatprep.subr.mxu0 0.0
        %1602 = vmatpush1.xpose.msra.mxu0 0.0
        %1603 = vmatprep.subr.mxu0 0.0
        %1604 = vmatpush1.xpose.msra.mxu0 0.0
        %1605 = vmatprep.subr.mxu0 0.0
        %1606 = vmatpush1.xpose.msra.mxu0 0.0
        %1607 = vmatprep.subr.mxu0 0.0
        %1608 = vmatpush1.xpose.msra.mxu0 0.0
        %1609 = vmatprep.subr.mxu0 0.0
        %1610 = vmatpush1.xpose.msra.mxu0 0.0
        %1611 = vmatprep.subr.mxu0 0.0
        %1612 = vmatpush1.xpose.msra.mxu0 0.0
        %1613 = vmatprep.subr.mxu0 0.0
        %1614 = vmatpush1.xpose.msra.mxu0 0.0
        %1615 = vmatprep.subr.mxu0 0.0
        %1616 = vmatpush1.xpose.msra.mxu0 0.0
        %1617 = vmatprep.subr.mxu0 0.0
        %1618 = vmatpush1.xpose.msra.mxu0 0.0
        %1619 = vmatprep.subr.mxu0 0.0
        %1620 = vmatpush1.xpose.msra.mxu0 0.0
        %1621 = vmatprep.subr.mxu0 0.0
        %1622 = vmatpush1.xpose.msra.mxu0 0.0
        %1623 = vmatprep.subr.mxu0 0.0
        %1624 = vmatpush1.xpose.msra.mxu0 0.0
        %1625 = vmatprep.subr.mxu0 0.0
        %1626 = vmatpush1.xpose.msra.mxu0 0.0
        %1627 = vmatprep.subr.mxu0 0.0
        %1628 = vmatpush1.xpose.msra.mxu0 0.0
        %1629 = vmatprep.subr.mxu0 0.0
        %1630 = vmatpush1.xpose.msra.mxu0 0.0
        %1631 = vmatprep.subr.mxu0 0.0
        %1632 = vmatpush1.xpose.msra.mxu0 0.0
        %1633 = vmatprep.subr.mxu0 0.0
        %1634 = vmatpush1.xpose.msra.mxu0 0.0
        %1635 = vmatprep.subr.mxu0 0.0
        %1636 = vmatpush1.xpose.msra.mxu0 0.0
        %1637 = vmatprep.subr.mxu0 0.0
        %1638 = vmatpush1.xpose.msra.mxu0 0.0
        %1639 = vmatprep.subr.mxu0 0.0
        %1640 = vmatpush1.xpose.msra.mxu0 0.0
        %1641 = vmatprep.mubr.f32.mxu0 0.0
        %1642 = vmatmul.mubr.f32.gmra.mrb[0].mxu0 %v954
        %v1643 = vpop.f32.mrb[0].mxu0
        %v1644 = vadd.f32 0.0, %v1643
        %v1645 = vpop.f32.mrb[0].mxu0
        %1646 = vmatprep.mubr.f32.mxu0 0.0
        %1647 = vmatmul.mubr.f32.gmra.mrb[0].mxu0 %v959
        %v1648 = vpop.f32.mrb[0].mxu0
        %v1649 = vadd.f32 0.0, %v1648
        %v1650 = vpop.f32.mrb[0].mxu0
        %1651 = vmatprep.mubr.f32.mxu0 0.0
        %1652 = vmatmul.mubr.f32.gmra.mrb[0].mxu0 %v964
        %v1653 = vpop.f32.mrb[0].mxu0
        %v1654 = vadd.f32 0.0, %v1653
        %v1655 = vpop.f32.mrb[0].mxu0
        %1656 = vmatprep.mubr.f32.mxu0 0.0
        %1657 = vmatmul.mubr.f32.gmra.mrb[0].mxu0 %v969
        %v1658 = vpop.f32.mrb[0].mxu0
        %v1659 = vadd.f32 0.0, %v1658
        %v1660 = vpop.f32.mrb[0].mxu0
        %1661 = vdwg.mxu0
        %v1662 = vmul.f32 %v1644, 0.17677669
        %v1663 = vmul.f32 %v1649, 0.17677669
        %v1664 = vmul.f32 %v1654, 0.17677669
        %v1665 = vmul.f32 %v1659, 0.17677669
        %v1667 = vsel %vm404, %v1662, 0
        %v1670 = vsel %vm404, %v1663, 0
        %v1673 = vsel %vm404, %v1664, 0
        %v1676 = vsel %vm404, %v1665, 0
        %1678 = vmatprep.subr.mxu0 0.0
        %1679 = vmatpush1.msra.mxu0 %v1537
        %1680 = vmatprep.subr.mxu0 0.0
        %1681 = vmatpush1.msra.mxu0 %v1538
        %1682 = vmatprep.subr.mxu0 0.0
        %1683 = vmatpush1.msra.mxu0 %v1539
        %1684 = vmatprep.subr.mxu0 0.0
        %1685 = vmatpush1.msra.mxu0 %v1540
        %1686 = vmatprep.subr.mxu0 0.0
        %1687 = vmatpush1.msra.mxu0 0.0
        %1688 = vmatprep.subr.mxu0 0.0
        %1689 = vmatpush1.msra.mxu0 0.0
        %1690 = vmatprep.subr.mxu0 0.0
        %1691 = vmatpush1.msra.mxu0 0.0
        %1692 = vmatprep.subr.mxu0 0.0
        %1693 = vmatpush1.msra.mxu0 0.0
        %1694 = vmatprep.subr.mxu0 0.0
        %1695 = vmatpush1.msra.mxu0 0.0
        %1696 = vmatprep.subr.mxu0 0.0
        %1697 = vmatpush1.msra.mxu0 0.0
        %1698 = vmatprep.subr.mxu0 0.0
        %1699 = vmatpush1.msra.mxu0 0.0
        %1700 = vmatprep.subr.mxu0 0.0
        %1701 = vmatpush1.msra.mxu0 0.0
        %1702 = vmatprep.subr.mxu0 0.0
        %1703 = vmatpush1.msra.mxu0 0.0
        %1704 = vmatprep.subr.mxu0 0.0
        %1705 = vmatpush1.msra.mxu0 0.0
        %1706 = vmatprep.subr.mxu0 0.0
        %1707 = vmatpush1.msra.mxu0 0.0
        %1708 = vmatprep.subr.mxu0 0.0
        %1709 = vmatpush1.msra.mxu0 0.0
        %1710 = vmatprep.subr.mxu0 0.0
        %1711 = vmatpush1.msra.mxu0 0.0
        %1712 = vmatprep.subr.mxu0 0.0
        %1713 = vmatpush1.msra.mxu0 0.0
        %1714 = vmatprep.subr.mxu0 0.0
        %1715 = vmatpush1.msra.mxu0 0.0
        %1716 = vmatprep.subr.mxu0 0.0
        %1717 = vmatpush1.msra.mxu0 0.0
        %1718 = vmatprep.subr.mxu0 0.0
        %1719 = vmatpush1.msra.mxu0 0.0
        %1720 = vmatprep.subr.mxu0 0.0
        %1721 = vmatpush1.msra.mxu0 0.0
        %1722 = vmatprep.subr.mxu0 0.0
        %1723 = vmatpush1.msra.mxu0 0.0
        %1724 = vmatprep.subr.mxu0 0.0
        %1725 = vmatpush1.msra.mxu0 0.0
        %1726 = vmatprep.subr.mxu0 0.0
        %1727 = vmatpush1.msra.mxu0 0.0
        %1728 = vmatprep.subr.mxu0 0.0
        %1729 = vmatpush1.msra.mxu0 0.0
        %1730 = vmatprep.subr.mxu0 0.0
        %1731 = vmatpush1.msra.mxu0 0.0
        %1732 = vmatprep.subr.mxu0 0.0
        %1733 = vmatpush1.msra.mxu0 0.0
        %1734 = vmatprep.subr.mxu0 0.0
        %1735 = vmatpush1.msra.mxu0 0.0
        %1736 = vmatprep.subr.mxu0 0.0
        %1737 = vmatpush1.msra.mxu0 0.0
        %1738 = vmatprep.subr.mxu0 0.0
        %1739 = vmatpush1.msra.mxu0 0.0
        %1740 = vmatprep.subr.mxu0 0.0
        %1741 = vmatpush1.msra.mxu0 0.0
        %1742 = vmatprep.mubr.f32.mxu0 0.0
        %1743 = vmatmul.mubr.f32.gmra.mrb[0].mxu0 %v1667
        %v1744 = vpop.f32.mrb[0].mxu0
        %v1745 = vadd.f32 0.0, %v1744
        %v1746 = vpop.f32.mrb[0].mxu0
        %1747 = vmatprep.mubr.f32.mxu0 0.0
        %1748 = vmatmul.mubr.f32.gmra.mrb[0].mxu0 %v1670
        %v1749 = vpop.f32.mrb[0].mxu0
        %v1750 = vadd.f32 0.0, %v1749
        %v1751 = vpop.f32.mrb[0].mxu0
        %1752 = vmatprep.mubr.f32.mxu0 0.0
        %1753 = vmatmul.mubr.f32.gmra.mrb[0].mxu0 %v1673
        %v1754 = vpop.f32.mrb[0].mxu0
        %v1755 = vadd.f32 0.0, %v1754
        %v1756 = vpop.f32.mrb[0].mxu0
        %1757 = vmatprep.mubr.f32.mxu0 0.0
        %1758 = vmatmul.mubr.f32.gmra.mrb[0].mxu0 %v1676
        %v1759 = vpop.f32.mrb[0].mxu0
        %v1760 = vadd.f32 0.0, %v1759
        %v1761 = vpop.f32.mrb[0].mxu0
        %1762 = vdwg.mxu0
        %v1763 = vmax.f32 %v580, %v585
        %v1764 = vmax.f32 %v590, %v595
        %v1765 = vmax.f32 %v1763, %v1764
        %v1766 = vrot.slane %v1765, 4
        %v1767 = vmax.f32 %v1765, %v1766
        %v1768 = vrot.slane %v1767, 2
        %v1769 = vmax.f32 %v1767, %v1768
        %v1770 = vrot.slane %v1769, 1
        %v1771 = vmax.f32 %v1769, %v1770
        %v1772 = vsub.f32 %v580, %v1771
        %v1773 = vsub.f32 %v585, %v1771
        %v1774 = vsub.f32 %v590, %v1771
        %v1775 = vsub.f32 %v595, %v1771
        %v1776 = vmul.f32 %v1772, 1.442695
        %v1777 = vpow.pop %v1776
        %v1778 = vmul.f32 %v1773, 1.442695
        %v1779 = vpow.pop %v1778
        %v1780 = vmul.f32 %v1774, 1.442695
        %v1781 = vpow.pop %v1780
        %v1782 = vmul.f32 %v1775, 1.442695
        %v1783 = vpow.pop %v1782
        %v1784 = vadd.f32 %v1777, %v1779
        %v1785 = vadd.f32 %v1784, %v1781
        %v1786 = vadd.f32 %v1785, %v1783
        %v1787 = vrot.slane %v1786, 4
        %v1788 = vadd.f32 %v1786, %v1787
        %v1789 = vrot.slane %v1788, 2
        %v1790 = vadd.f32 %v1788, %v1789
        %v1791 = vrot.slane %v1790, 1
        %v1792 = vadd.f32 %v1790, %v1791
        %v1793 = vrcp.pop %v1792
        %v1794 = vmul.f32 %v1777, %v1793
        %v1795 = vmul.f32 %v1779, %v1793
        %v1796 = vmul.f32 %v1781, %v1793
        %v1797 = vmul.f32 %v1783, %v1793
        %1798 = vmax.xlane.f32.xlu0 %v777
        %v1799 = vpop.xlane.xlu0 %1798
        %1800 = vmax.xlane.f32.xlu0 %v782
        %v1801 = vpop.xlane.xlu0 %1800
        %1802 = vmax.xlane.f32.xlu0 %v787
        %v1803 = vpop.xlane.xlu0 %1802
        %1804 = vmax.xlane.f32.xlu0 %v792
        %v1805 = vpop.xlane.xlu0 %1804
        %v1806 = vsub.f32 %v777, %v1799
        %v1807 = vsub.f32 %v782, %v1801
        %v1808 = vsub.f32 %v787, %v1803
        %v1809 = vsub.f32 %v792, %v1805
        %v1810 = vmul.f32 %v1806, 1.442695
        %v1811 = vpow.pop %v1810
        %v1812 = vmul.f32 %v1807, 1.442695
        %v1813 = vpow.pop %v1812
        %v1814 = vmul.f32 %v1808, 1.442695
        %v1815 = vpow.pop %v1814
        %v1816 = vmul.f32 %v1809, 1.442695
        %v1817 = vpow.pop %v1816
        %1818 = vadd.xlane.f32.xlu0 %v1811
        %v1819 = vpop.xlane.xlu0 %1818
        %1820 = vadd.xlane.f32.xlu0 %v1813
        %v1821 = vpop.xlane.xlu0 %1820
        %1822 = vadd.xlane.f32.xlu0 %v1815
        %v1823 = vpop.xlane.xlu0 %1822
        %1824 = vadd.xlane.f32.xlu0 %v1817
        %v1825 = vpop.xlane.xlu0 %1824
        %v1826 = vrcp.pop %v1819
        %v1827 = vrcp.pop %v1821
        %v1828 = vrcp.pop %v1823
        %v1829 = vrcp.pop %v1825
        %v1830 = vmul.f32 %v1811, %v1826
        %v1831 = vmul.f32 %v1813, %v1827
        %v1832 = vmul.f32 %v1815, %v1828
        %v1833 = vmul.f32 %v1817, %v1829
        %1834 = vmatprep.subr.mxu0 0.0
        %1835 = vmatpush1.xpose.msra.mxu0 %v1830
        %1836 = vmatprep.subr.mxu0 0.0
        %1837 = vmatpush1.xpose.msra.mxu0 %v1831
        %1838 = vmatprep.subr.mxu0 0.0
        %1839 = vmatpush1.xpose.msra.mxu0 %v1832
        %1840 = vmatprep.subr.mxu0 0.0
        %1841 = vmatpush1.xpose.msra.mxu0 %v1833
        %1842 = vmatprep.subr.mxu0 0.0
        %1843 = vmatpush1.xpose.msra.mxu0 0.0
        %1844 = vmatprep.subr.mxu0 0.0
        %1845 = vmatpush1.xpose.msra.mxu0 0.0
        %1846 = vmatprep.subr.mxu0 0.0
        %1847 = vmatpush1.xpose.msra.mxu0 0.0
        %1848 = vmatprep.subr.mxu0 0.0
        %1849 = vmatpush1.xpose.msra.mxu0 0.0
        %1850 = vmatprep.subr.mxu0 0.0
        %1851 = vmatpush1.xpose.msra.mxu0 0.0
        %1852 = vmatprep.subr.mxu0 0.0
        %1853 = vmatpush1.xpose.msra.mxu0 0.0
        %1854 = vmatprep.subr.mxu0 0.0
        %1855 = vmatpush1.xpose.msra.mxu0 0.0
        %1856 = vmatprep.subr.mxu0 0.0
        %1857 = vmatpush1.xpose.msra.mxu0 0.0
        %1858 = vmatprep.subr.mxu0 0.0
        %1859 = vmatpush1.xpose.msra.mxu0 0.0
        %1860 = vmatprep.subr.mxu0 0.0
        %1861 = vmatpush1.xpose.msra.mxu0 0.0
        %1862 = vmatprep.subr.mxu0 0.0
        %1863 = vmatpush1.xpose.msra.mxu0 0.0
        %1864 = vmatprep.subr.mxu0 0.0
        %1865 = vmatpush1.xpose.msra.mxu0 0.0
        %1866 = vmatprep.subr.mxu0 0.0
        %1867 = vmatpush1.xpose.msra.mxu0 0.0
        %1868 = vmatprep.subr.mxu0 0.0
        %1869 = vmatpush1.xpose.msra.mxu0 0.0
        %1870 = vmatprep.subr.mxu0 0.0
        %1871 = vmatpush1.xpose.msra.mxu0 0.0
        %1872 = vmatprep.subr.mxu0 0.0
        %1873 = vmatpush1.xpose.msra.mxu0 0.0
        %1874 = vmatprep.subr.mxu0 0.0
        %1875 = vmatpush1.xpose.msra.mxu0 0.0
        %1876 = vmatprep.subr.mxu0 0.0
        %1877 = vmatpush1.xpose.msra.mxu0 0.0
        %1878 = vmatprep.subr.mxu0 0.0
        %1879 = vmatpush1.xpose.msra.mxu0 0.0
        %1880 = vmatprep.subr.mxu0 0.0
        %1881 = vmatpush1.xpose.msra.mxu0 0.0
        %1882 = vmatprep.subr.mxu0 0.0
        %1883 = vmatpush1.xpose.msra.mxu0 0.0
        %1884 = vmatprep.subr.mxu0 0.0
        %1885 = vmatpush1.xpose.msra.mxu0 0.0
        %1886 = vmatprep.subr.mxu0 0.0
        %1887 = vmatpush1.xpose.msra.mxu0 0.0
        %1888 = vmatprep.subr.mxu0 0.0
        %1889 = vmatpush1.xpose.msra.mxu0 0.0
        %1890 = vmatprep.subr.mxu0 0.0
        %1891 = vmatpush1.xpose.msra.mxu0 0.0
        %1892 = vmatprep.subr.mxu0 0.0
        %1893 = vmatpush1.xpose.msra.mxu0 0.0
        %1894 = vmatprep.subr.mxu0 0.0
        %1895 = vmatpush1.xpose.msra.mxu0 0.0
        %1896 = vmatprep.subr.mxu0 0.0
        %1897 = vmatpush1.xpose.msra.mxu0 0.0
        %1898 = vmatprep.mubr.f32.mxu0 0.0
        %1899 = vmatmul.mubr.f32.gmra.mrb[0].mxu0 %v974
        %v1900 = vpop.f32.mrb[0].mxu0
        %v1901 = vadd.f32 0.0, %v1900
        %v1902 = vpop.f32.mrb[0].mxu0
        %1903 = vmatprep.mubr.f32.mxu0 0.0
        %1904 = vmatmul.mubr.f32.gmra.mrb[0].mxu0 %v979
        %v1905 = vpop.f32.mrb[0].mxu0
        %v1906 = vadd.f32 0.0, %v1905
        %v1907 = vpop.f32.mrb[0].mxu0
        %1908 = vmatprep.mubr.f32.mxu0 0.0
        %1909 = vmatmul.mubr.f32.gmra.mrb[0].mxu0 %v984
        %v1910 = vpop.f32.mrb[0].mxu0
        %v1911 = vadd.f32 0.0, %v1910
        %v1912 = vpop.f32.mrb[0].mxu0
        %1913 = vmatprep.mubr.f32.mxu0 0.0
        %1914 = vmatmul.mubr.f32.gmra.mrb[0].mxu0 %v989
        %v1915 = vpop.f32.mrb[0].mxu0
        %v1916 = vadd.f32 0.0, %v1915
        %v1917 = vpop.f32.mrb[0].mxu0
        %1918 = vdwg.mxu0
        %v1919 = vmul.f32 %v1901, 0.17677669
        %v1920 = vmul.f32 %v1906, 0.17677669
        %v1921 = vmul.f32 %v1911, 0.17677669
        %v1922 = vmul.f32 %v1916, 0.17677669
        %v1924 = vsel %vm404, %v1919, 0
        %v1927 = vsel %vm404, %v1920, 0
        %v1930 = vsel %vm404, %v1921, 0
        %v1933 = vsel %vm404, %v1922, 0
        %1935 = vmatprep.subr.mxu0 0.0
        %1936 = vmatpush1.msra.mxu0 %v1794
        %1937 = vmatprep.subr.mxu0 0.0
        %1938 = vmatpush1.msra.mxu0 %v1795
        %1939 = vmatprep.subr.mxu0 0.0
        %1940 = vmatpush1.msra.mxu0 %v1796
        %1941 = vmatprep.subr.mxu0 0.0
        %1942 = vmatpush1.msra.mxu0 %v1797
        %1943 = vmatprep.subr.mxu0 0.0
        %1944 = vmatpush1.msra.mxu0 0.0
        %1945 = vmatprep.subr.mxu0 0.0
        %1946 = vmatpush1.msra.mxu0 0.0
        %1947 = vmatprep.subr.mxu0 0.0
        %1948 = vmatpush1.msra.mxu0 0.0
        %1949 = vmatprep.subr.mxu0 0.0
        %1950 = vmatpush1.msra.mxu0 0.0
        %1951 = vmatprep.subr.mxu0 0.0
        %1952 = vmatpush1.msra.mxu0 0.0
        %1953 = vmatprep.subr.mxu0 0.0
        %1954 = vmatpush1.msra.mxu0 0.0
        %1955 = vmatprep.subr.mxu0 0.0
        %1956 = vmatpush1.msra.mxu0 0.0
        %1957 = vmatprep.subr.mxu0 0.0
        %1958 = vmatpush1.msra.mxu0 0.0
        %1959 = vmatprep.subr.mxu0 0.0
        %1960 = vmatpush1.msra.mxu0 0.0
        %1961 = vmatprep.subr.mxu0 0.0
        %1962 = vmatpush1.msra.mxu0 0.0
        %1963 = vmatprep.subr.mxu0 0.0
        %1964 = vmatpush1.msra.mxu0 0.0
        %1965 = vmatprep.subr.mxu0 0.0
        %1966 = vmatpush1.msra.mxu0 0.0
        %1967 = vmatprep.subr.mxu0 0.0
        %1968 = vmatpush1.msra.mxu0 0.0
        %1969 = vmatprep.subr.mxu0 0.0
        %1970 = vmatpush1.msra.mxu0 0.0
        %1971 = vmatprep.subr.mxu0 0.0
        %1972 = vmatpush1.msra.mxu0 0.0
        %1973 = vmatprep.subr.mxu0 0.0
        %1974 = vmatpush1.msra.mxu0 0.0
        %1975 = vmatprep.subr.mxu0 0.0
        %1976 = vmatpush1.msra.mxu0 0.0
        %1977 = vmatprep.subr.mxu0 0.0
        %1978 = vmatpush1.msra.mxu0 0.0
        %1979 = vmatprep.subr.mxu0 0.0
        %1980 = vmatpush1.msra.mxu0 0.0
        %1981 = vmatprep.subr.mxu0 0.0
        %1982 = vmatpush1.msra.mxu0 0.0
        %1983 = vmatprep.subr.mxu0 0.0
        %1984 = vmatpush1.msra.mxu0 0.0
        %1985 = vmatprep.subr.mxu0 0.0
        %1986 = vmatpush1.msra.mxu0 0.0
        %1987 = vmatprep.subr.mxu0 0.0
        %1988 = vmatpush1.msra.mxu0 0.0
        %1989 = vmatprep.subr.mxu0 0.0
        %1990 = vmatpush1.msra.mxu0 0.0
        %1991 = vmatprep.subr.mxu0 0.0
        %1992 = vmatpush1.msra.mxu0 0.0
        %1993 = vmatprep.subr.mxu0 0.0
        %1994 = vmatpush1.msra.mxu0 0.0
        %1995 = vmatprep.subr.mxu0 0.0
        %1996 = vmatpush1.msra.mxu0 0.0
        %1997 = vmatprep.subr.mxu0 0.0
        %1998 = vmatpush1.msra.mxu0 0.0
        %1999 = vmatprep.mubr.f32.mxu0 0.0
        %2000 = vmatmul.mubr.f32.gmra.mrb[0].mxu0 %v1924
        %v2001 = vpop.f32.mrb[0].mxu0
        %v2002 = vadd.f32 0.0, %v2001
        %v2003 = vpop.f32.mrb[0].mxu0
        %2004 = vmatprep.mubr.f32.mxu0 0.0
        %2005 = vmatmul.mubr.f32.gmra.mrb[0].mxu0 %v1927
        %v2006 = vpop.f32.mrb[0].mxu0
        %v2007 = vadd.f32 0.0, %v2006
        %v2008 = vpop.f32.mrb[0].mxu0
        %2009 = vmatprep.mubr.f32.mxu0 0.0
        %2010 = vmatmul.mubr.f32.gmra.mrb[0].mxu0 %v1930
        %v2011 = vpop.f32.mrb[0].mxu0
        %v2012 = vadd.f32 0.0, %v2011
        %v2013 = vpop.f32.mrb[0].mxu0
        %2014 = vmatprep.mubr.f32.mxu0 0.0
        %2015 = vmatmul.mubr.f32.gmra.mrb[0].mxu0 %v1933
        %v2016 = vpop.f32.mrb[0].mxu0
        %v2017 = vadd.f32 0.0, %v2016
        %v2018 = vpop.f32.mrb[0].mxu0
        %2019 = vdwg.mxu0
        %2021 = vset.pattern.permute.xlu0 0
        %2022 = vperm.xlu0 %2021, %v396
        %v2023 = vpop.permute.xlu0 %2022
        %2026 = vset.pattern.permute.xlu0 0
        %2027 = vperm.xlu0 %2026, %v397
        %v2028 = vpop.permute.xlu0 %2027
        %2031 = vset.pattern.permute.xlu0 0
        %2032 = vperm.xlu0 %2031, %v398
        %v2033 = vpop.permute.xlu0 %2032
        %2036 = vset.pattern.permute.xlu0 0
        %2037 = vperm.xlu0 %2036, %v399
        %v2038 = vpop.permute.xlu0 %2037
        %2040 = vmatprep.subr.mxu0 0.0
        %2041 = vmatpush1.msra.mxu0 %v1231
        %2042 = vmatprep.subr.mxu0 0.0
        %2043 = vmatpush1.msra.mxu0 %v1236
        %2044 = vmatprep.subr.mxu0 0.0
        %2045 = vmatpush1.msra.mxu0 %v1241
        %2046 = vmatprep.subr.mxu0 0.0
        %2047 = vmatpush1.msra.mxu0 %v1246
        %2048 = vmatprep.subr.mxu0 0.0
        %2049 = vmatpush1.msra.mxu0 %v1488
        %2050 = vmatprep.subr.mxu0 0.0
        %2051 = vmatpush1.msra.mxu0 %v1493
        %2052 = vmatprep.subr.mxu0 0.0
        %2053 = vmatpush1.msra.mxu0 %v1498
        %2054 = vmatprep.subr.mxu0 0.0
        %2055 = vmatpush1.msra.mxu0 %v1503
        %2056 = vmatprep.subr.mxu0 0.0
        %2057 = vmatpush1.msra.mxu0 %v1745
        %2058 = vmatprep.subr.mxu0 0.0
        %2059 = vmatpush1.msra.mxu0 %v1750
        %2060 = vmatprep.subr.mxu0 0.0
        %2061 = vmatpush1.msra.mxu0 %v1755
        %2062 = vmatprep.subr.mxu0 0.0
        %2063 = vmatpush1.msra.mxu0 %v1760
        %2064 = vmatprep.subr.mxu0 0.0
        %2065 = vmatpush1.msra.mxu0 %v2002
        %2066 = vmatprep.subr.mxu0 0.0
        %2067 = vmatpush1.msra.mxu0 %v2007
        %2068 = vmatprep.subr.mxu0 0.0
        %2069 = vmatpush1.msra.mxu0 %v2012
        %2070 = vmatprep.subr.mxu0 0.0
        %2071 = vmatpush1.msra.mxu0 %v2017
        %2072 = vmatprep.subr.mxu0 0.0
        %2073 = vmatpush1.msra.mxu0 0.0
        %2074 = vmatprep.subr.mxu0 0.0
        %2075 = vmatpush1.msra.mxu0 0.0
        %2076 = vmatprep.subr.mxu0 0.0
        %2077 = vmatpush1.msra.mxu0 0.0
        %2078 = vmatprep.subr.mxu0 0.0
        %2079 = vmatpush1.msra.mxu0 0.0
        %2080 = vmatprep.subr.mxu0 0.0
        %2081 = vmatpush1.msra.mxu0 0.0
        %2082 = vmatprep.subr.mxu0 0.0
        %2083 = vmatpush1.msra.mxu0 0.0
        %2084 = vmatprep.subr.mxu0 0.0
        %2085 = vmatpush1.msra.mxu0 0.0
        %2086 = vmatprep.subr.mxu0 0.0
        %2087 = vmatpush1.msra.mxu0 0.0
        %2088 = vmatprep.subr.mxu0 0.0
        %2089 = vmatpush1.msra.mxu0 0.0
        %2090 = vmatprep.subr.mxu0 0.0
        %2091 = vmatpush1.msra.mxu0 0.0
        %2092 = vmatprep.subr.mxu0 0.0
        %2093 = vmatpush1.msra.mxu0 0.0
        %2094 = vmatprep.subr.mxu0 0.0
        %2095 = vmatpush1.msra.mxu0 0.0
        %2096 = vmatprep.subr.mxu0 0.0
        %2097 = vmatpush1.msra.mxu0 0.0
        %2098 = vmatprep.subr.mxu0 0.0
        %2099 = vmatpush1.msra.mxu0 0.0
        %2100 = vmatprep.subr.mxu0 0.0
        %2101 = vmatpush1.msra.mxu0 0.0
        %2102 = vmatprep.subr.mxu0 0.0
        %2103 = vmatpush1.msra.mxu0 0.0
        %2104 = vmatprep.mubr.f32.mxu0 0.0
        %2105 = vmatmul.mubr.f32.gmra.mrb[0].mxu0 %v392
        %v2106 = vpop.f32.mrb[0].mxu0
        %v2107 = vadd.f32 %v2023, %v2106
        %v2108 = vpop.f32.mrb[0].mxu0
        %2109 = vmatprep.mubr.f32.mxu0 0.0
        %2110 = vmatmul.mubr.f32.gmra.mrb[0].mxu0 %v393
        %v2111 = vpop.f32.mrb[0].mxu0
        %v2112 = vadd.f32 %v2028, %v2111
        %v2113 = vpop.f32.mrb[0].mxu0
        %2114 = vmatprep.mubr.f32.mxu0 0.0
        %2115 = vmatmul.mubr.f32.gmra.mrb[0].mxu0 %v394
        %v2116 = vpop.f32.mrb[0].mxu0
        %v2117 = vadd.f32 %v2033, %v2116
        %v2118 = vpop.f32.mrb[0].mxu0
        %2119 = vmatprep.mubr.f32.mxu0 0.0
        %2120 = vmatmul.mubr.f32.gmra.mrb[0].mxu0 %v395
        %v2121 = vpop.f32.mrb[0].mxu0
        %v2122 = vadd.f32 %v2038, %v2121
        %v2123 = vpop.f32.mrb[0].mxu0
        %2124 = vdwg.mxu0
        %v2125 = vmul.f32 %v2107, %v2107
        %v2126 = vmul.f32 %v2112, %v2112
        %v2127 = vmul.f32 %v2117, %v2117
        %v2128 = vmul.f32 %v2122, %v2122
        %v2129 = vadd.f32 %v2125, %v2126
        %v2130 = vadd.f32 %v2129, %v2127
        %v2131 = vadd.f32 %v2130, %v2128
        %v2132 = vrot.slane %v2131, 4
        %v2133 = vadd.f32 %v2131, %v2132
        %v2134 = vrot.slane %v2133, 2
        %v2135 = vadd.f32 %v2133, %v2134
        %v2136 = vrot.slane %v2135, 1
        %v2137 = vadd.f32 %v2135, %v2136
        %v2138 = vmax.f32 %v2137, 1e-24
        %v2139 = vrsqrt.pop %v2138
        %v2140 = vmul.f32 %v2107, %v2139
        %v2141 = vmul.f32 %v2112, %v2139
        %v2142 = vmul.f32 %v2117, %v2139
        %v2143 = vmul.f32 %v2122, %v2139
        %2144 = vset.pattern.permute.xlu0 1
        %2145 = vperm.xlu0 %2144, %v396
        %v2146 = vpop.permute.xlu0 %2145
        %2148 = vset.pattern.permute.xlu0 1
        %2149 = vperm.xlu0 %2148, %v397
        %v2150 = vpop.permute.xlu0 %2149
        %2152 = vset.pattern.permute.xlu0 1
        %2153 = vperm.xlu0 %2152, %v398
        %v2154 = vpop.permute.xlu0 %2153
        %2156 = vset.pattern.permute.xlu0 1
        %2157 = vperm.xlu0 %2156, %v399
        %v2158 = vpop.permute.xlu0 %2157
        %v2160 = vmul.f32 %v2140, %v2146
        %v2161 = vmul.f32 %v2141, %v2150
        %v2162 = vmul.f32 %v2142, %v2154
        %v2163 = vmul.f32 %v2143, %v2158
        %v2164 = vadd.f32 %v2160, %v400
        %v2165 = vadd.f32 %v2161, %v401
        %v2166 = vadd.f32 %v2162, %v402
        %v2167 = vadd.f32 %v2163, %v403
        %2168 = vst [vmem:[%s328] sm:$0xff] %v2164
        %2169 = vst [vmem:[%s328 + $0x8] sm:$0xff] %v2165
        %2170 = vst [vmem:[%s328 + $0x10] sm:$0xff] %v2166
        %2171 = vst [vmem:[%s328 + $0x18] sm:$0xff] %v2167
        %s2172 = sand.u32 %s213, 1
        %s2173 = scalar_lea.sflag [#allocation3], %s2172
        %s2174 = sand.u32 %s213, 1
        %s2175 = smul.addr %s2174, 32
        %s2176 = scalar_lea.vmem [#allocation2], %s2175
        // Predicated region
        $region53: #{_run.1} parent=51 // pred_check
          %p2177 = pneg %p223
        $region54: #{_run.1} parent=51 // pred_check_branch
          %2179 = sbr.rel (%p2177) target = $region56
        $region55: #{_run.1} parent=51 // pred_region
          %s2181 = ssub.s32 512, 512
          %2182 = vsyncadd %s2173, %s2181
          %s2183 = smul.addr %s22, 4
          %s2184 = smul.addr %s2183, 128
          %s2185 = scalar_lea.hbm %s8, %s2184
          %s2186 = sshll.u32 %s2176, 4
          %s2187 = int_to_ptr.vmem [resolvable:$true] %s2186
          %2192 = dma.vmem_to_hbm [thread:$0]  %s2187, 512, %s2185, %s2173, 128, 128, 8
        $region56: #{_run.1} parent=51 // pred_fallthru
          _
      $region52: #{_run.1} parent=5 // pred_fallthru
        _
      %p2193 = scmp.le.s32.totalorder 2, %s17
      // Predicated region
      $region57: #{_run.1} parent=5 // pred_check
        %p2194 = pneg %p2193
      $region58: #{_run.1} parent=5 // pred_check_branch
        %2196 = sbr.rel (%p2194) target = $region60
      $region59: #{_run.1} parent=5 // pred_region
        %s2197 = ssub.s32 %s17, 2
        // Predicated region
        $region61: #{_run.1} parent=59 // pred_check
          %p2198 = pneg %p229
        $region62: #{_run.1} parent=59 // pred_check_branch
          %2200 = sbr.rel (%p2198) target = $region64
        $region63: #{_run.1} parent=59 // pred_region
          %s2201 = sand.u32 %s214, 1
          %s2202 = scalar_lea.sflag [#allocation3], %s2201
          %s2203 = sand.u32 %s214, 1
          %s2204 = smul.addr %s2203, 32
          %s2205 = scalar_lea.vmem [#allocation2], %s2204
          %2206 = dma.done %s2202, 512
        $region64: #{_run.1} parent=59 // pred_fallthru
          _
      $region60: #{_run.1} parent=5 // pred_fallthru
        _
    $region6: #{_run.1} parent=1 // loop_footer
      %s21 = sadd.s32 1, %s17
    $region7: #{_run.1} parent=1 // loop_footer_branch
      %16 = sbr.rel target = $region3
    $region8: #{_run.1} parent=1 // loop_exit
      _
    %2207 = vsyncpa [#allocation3], 1
    %s2208 = scalar_lea.sflag [#allocation3], 1
    %2209 = vsyncpa %s2208, 1

</llo_original>
